<compile_context>
chip_gen: v7x
topology: tpu7x:2x2x1
jax: 0.10.0
libtpu: 0.0.40
codegen_flags: <defaults>
</compile_context>

<pallas_src>
import functools

import jax
import jax.numpy as jnp
from jax.experimental import pallas as pl
from jax.experimental.pallas import tpu as pltpu

EPS = 1e-5          # nn.GroupNorm default
NUM_GROUPS = 16     # GroupNorm(16, C)

_COMPILER_PARAMS = pltpu.CompilerParams(
    dimension_semantics=("parallel",),     # batch axis: pipeline + megacore sharding
    vmem_limit_bytes=32 * 1024 * 1024,     # explicit; leaves headroom on v7x (64 MiB/TC)
)


# ------------------------------------------------------------------ helpers --
def _group_map(C, num_groups=NUM_GROUPS):
    """(C, C) 0/1 group-membership matrix for GroupNorm stat broadcasting."""
    cs = C // num_groups
    gidx = jnp.arange(C) // cs
    return (gidx[:, None] == gidx[None, :]).astype(jnp.float32)


def _row_spec(hw, c):
    # per-batch slab; leading batch dim squeezed out of the kernel Ref
    return pl.BlockSpec((None, hw, c), lambda n: (n, 0, 0))


def _const_spec(shape):
    nd = len(shape)
    return pl.BlockSpec(shape, lambda n, _nd=nd: (0,) * _nd)


def _gn_epilogue(y, gamma, beta, gmap, cs, relu):
    """GroupNorm(+optional ReLU) over a (HW, C) f32 tile.

    gmap is the (C, C) group-membership matrix: one tiny MXU dot both aggregates
    per-group statistics and broadcasts them back to per-channel lanes, avoiding
    awkward (1,C)->(G,cs) lane relayouts. Stats stay in f32.
    """
    hw = y.shape[0]
    cnt = jnp.float32(hw * cs)
    s = jnp.sum(y, axis=0, keepdims=True)                                  # (1, C)
    sq = jnp.sum(y * y, axis=0, keepdims=True)                             # (1, C)
    mean = jnp.dot(s, gmap, preferred_element_type=jnp.float32) / cnt      # (1, C)
    ex2 = jnp.dot(sq, gmap, preferred_element_type=jnp.float32) / cnt      # (1, C)
    var = ex2 - mean * mean                 # biased variance (matches PyTorch), f32
    inv = jax.lax.rsqrt(var + EPS)          # EUP slot
    out = (y - mean) * inv * gamma + beta
    if relu:
        out = jnp.maximum(out, 0.0)
    return out


# ------------------------------------------------------------------ kernels --
def _matmul_gn_kernel(x_ref, w_ref, gamma_ref, beta_ref, gmap_ref, o_ref, *, cs, relu):
    """(HW, Cin)bf16 @ (Cin, Cout)bf16 -> f32 acc, fused GroupNorm(+ReLU)."""
    acc = jnp.dot(x_ref[...], w_ref[...], preferred_element_type=jnp.float32)
    y = _gn_epilogue(acc, gamma_ref[...], beta_ref[...], gmap_ref[...], cs, relu)
    o_ref[...] = y.astype(o_ref.dtype)


def _final_ds_kernel(x2_ref, x0_ref, w3_ref, wd_ref, g3_ref, b3_ref, gd_ref, bd_ref,
                     gmap_ref, o_ref, *, cs):
    """conv3(1x1)+GN3, downsample conv(1x1)+GN, residual add, final ReLU — fused."""
    main = jnp.dot(x2_ref[...], w3_ref[...], preferred_element_type=jnp.float32)
    main = _gn_epilogue(main, g3_ref[...], b3_ref[...], gmap_ref[...], cs, relu=False)
    ident = jnp.dot(x0_ref[...], wd_ref[...], preferred_element_type=jnp.float32)
    ident = _gn_epilogue(ident, gd_ref[...], bd_ref[...], gmap_ref[...], cs, relu=False)
    o_ref[...] = jnp.maximum(main + ident, 0.0).astype(o_ref.dtype)


def _final_id_kernel(x2_ref, id_ref, w3_ref, g3_ref, b3_ref, gmap_ref, o_ref, *, cs):
    """conv3(1x1)+GN3 + identity residual + final ReLU (no downsample branch)."""
    main = jnp.dot(x2_ref[...], w3_ref[...], preferred_element_type=jnp.float32)
    main = _gn_epilogue(main, g3_ref[...], b3_ref[...], gmap_ref[...], cs, relu=False)
    o_ref[...] = jnp.maximum(main + id_ref[...].astype(jnp.float32), 0.0).astype(o_ref.dtype)


# ------------------------------------------------------------------ wrappers --
def fused_matmul_gn(x, w, gamma, beta, gmap, *, cs, relu, out_dtype):
    """Per-batch (HW, Cin) @ (Cin, Cout) with fused GroupNorm(+ReLU)."""
    N, HW, Cin = x.shape
    Cout = w.shape[1]
    kern = functools.partial(_matmul_gn_kernel, cs=cs, relu=relu)
    return pl.pallas_call(
        kern,
        out_shape=jax.ShapeDtypeStruct((N, HW, Cout), out_dtype),
        grid=(N,),
        in_specs=[_row_spec(HW, Cin),
                  _const_spec((Cin, Cout)),
                  _const_spec((1, Cout)),
                  _const_spec((1, Cout)),
                  _const_spec((Cout, Cout))],
        out_specs=_row_spec(HW, Cout),
        compiler_params=_COMPILER_PARAMS,
    )(x, w, gamma.reshape(1, Cout), beta.reshape(1, Cout), gmap)


def fused_final(x2, x0, w3, g3, b3, gmap, cs, wd=None, gd=None, bd=None):
    """conv3 + GN3 (+ downsample conv + GN) + residual add + final ReLU."""
    N, HW, Cmid = x2.shape
    Cout = w3.shape[1]
    if wd is not None:
        Cin = x0.shape[2]
        kern = functools.partial(_final_ds_kernel, cs=cs)
        return pl.pallas_call(
            kern,
            out_shape=jax.ShapeDtypeStruct((N, HW, Cout), jnp.float32),
            grid=(N,),
            in_specs=[_row_spec(HW, Cmid),
                      _row_spec(HW, Cin),
                      _const_spec((Cmid, Cout)),
                      _const_spec((Cin, Cout)),
                      _const_spec((1, Cout)),
                      _const_spec((1, Cout)),
                      _const_spec((1, Cout)),
                      _const_spec((1, Cout)),
                      _const_spec((Cout, Cout))],
            out_specs=_row_spec(HW, Cout),
            compiler_params=_COMPILER_PARAMS,
        )(x2, x0, w3, wd, g3.reshape(1, Cout), b3.reshape(1, Cout),
          gd.reshape(1, Cout), bd.reshape(1, Cout), gmap)

    # identity residual: only valid when inplanes == planes * expansion
    assert x0.shape[2] == Cout, "identity residual requires inplanes == planes*expansion"
    kern = functools.partial(_final_id_kernel, cs=cs)
    return pl.pallas_call(
        kern,
        out_shape=jax.ShapeDtypeStruct((N, HW, Cout), jnp.float32),
        grid=(N,),
        in_specs=[_row_spec(HW, Cmid),
                  _row_spec(HW, Cout),
                  _const_spec((Cmid, Cout)),
                  _const_spec((1, Cout)),
                  _const_spec((1, Cout)),
                  _const_spec((Cout, Cout))],
        out_specs=_row_spec(HW, Cout),
        compiler_params=_COMPILER_PARAMS,
    )(x2, x0, w3, g3.reshape(1, Cout), b3.reshape(1, Cout), gmap)


# --------------------------------------------------------------- Bottleneck --
def bottleneck_forward(x_nchw, params, num_groups=NUM_GROUPS):
    """Bottleneck forward (stride=1, dilation=1). NCHW in / NCHW out, f32."""
    x = jnp.transpose(x_nchw, (0, 2, 3, 1))                          # NCHW -> NHWC
    N, H, W_, Cin = x.shape
    planes = params["w1"].shape[1]
    outplanes = params["w3"].shape[1]
    cs_p, cs_o = planes // num_groups, outplanes // num_groups
    gmap_p, gmap_o = _group_map(planes, num_groups), _group_map(outplanes, num_groups)

    # bf16 MXU operands (f32 accumulation + f32 GN stats inside the kernels).
    xb = x.astype(jnp.bfloat16).reshape(N, H * W_, Cin)
    w1 = params["w1"].astype(jnp.bfloat16)                           # (Cin, planes)
    w2 = params["w2"].astype(jnp.bfloat16).reshape(9 * planes, planes)
    w3 = params["w3"].astype(jnp.bfloat16)                           # (planes, outplanes)

    # Stage 1: conv1 (1x1) + GN1 + ReLU — one kernel.
    out1 = fused_matmul_gn(xb, w1, params["g1"], params["b1"], gmap_p,
                           cs=cs_p, relu=True, out_dtype=jnp.bfloat16)

    # Stage 2: conv2 (3x3, pad=1, stride=1) as ONE im2col matmul (K = 9*planes)
    # + GN2 + ReLU — one kernel.
    # TODO(synk): replace wrapper-side pad+im2col with in-kernel halo loads to
    #             avoid materializing the 9x-wide patch tensor in HBM.
    xpad = jnp.pad(out1.reshape(N, H, W_, planes), ((0, 0), (1, 1), (1, 1), (0, 0)))
    cols = [xpad[:, kh:kh + H, kw:kw + W_, :] for kh in range(3) for kw in range(3)]
    patches = jnp.concatenate(cols, axis=-1).reshape(N, H * W_, 9 * planes)
    out2 = fused_matmul_gn(patches, w2, params["g2"], params["b2"], gmap_p,
                           cs=cs_p, relu=True, out_dtype=jnp.bfloat16)

    # Stage 3: conv3 (1x1) + GN3 + downsample (1x1 conv + GN) + residual add
    # + final ReLU — one kernel.
    if params.get("wd") is not None:
        wd = params["wd"].astype(jnp.bfloat16)
        y = fused_final(out2, xb, w3, params["g3"], params["b3"], gmap_o, cs_o,
                        wd=wd, gd=params["gd"], bd=params["bd"])
    else:
        y = fused_final(out2, xb, w3, params["g3"], params["b3"], gmap_o, cs_o)

    return jnp.transpose(y.reshape(N, H, W_, outplanes), (0, 3, 1, 2))  # NHWC -> NCHW


def init_params(key, inplanes, planes, expansion=4):
    ks = jax.random.split(key, 12)
    outplanes = planes * expansion

    def conv_w(k, fan_in, shape):
        return jax.random.normal(k, shape, jnp.float32) / jnp.sqrt(jnp.float32(fan_in))

    return {
        # conv weights in channels-last matmul layout: 1x1 (Cin, Cout); 3x3 (kh, kw, Cin, Cout)
        "w1": conv_w(ks[0], inplanes, (inplanes, planes)),
        "w2": conv_w(ks[1], 9 * planes, (3, 3, planes, planes)),
        "w3": conv_w(ks[2], planes, (planes, outplanes)),
        "wd": conv_w(ks[3], inplanes, (inplanes, outplanes)),
        # GroupNorm affine params (deterministic, non-trivial)
        "g1": 1.0 + 0.1 * jax.random.normal(ks[4], (planes,), jnp.float32),
        "b1": 0.1 * jax.random.normal(ks[5], (planes,), jnp.float32),
        "g2": 1.0 + 0.1 * jax.random.normal(ks[6], (planes,), jnp.float32),
        "b2": 0.1 * jax.random.normal(ks[7], (planes,), jnp.float32),
        "g3": 1.0 + 0.1 * jax.random.normal(ks[8], (outplanes,), jnp.float32),
        "b3": 0.1 * jax.random.normal(ks[9], (outplanes,), jnp.float32),
        "gd": 1.0 + 0.1 * jax.random.normal(ks[10], (outplanes,), jnp.float32),
        "bd": 0.1 * jax.random.normal(ks[11], (outplanes,), jnp.float32),
    }


# ---------------------------------------------------------------- reference --
def _reference_forward(x_nchw, params, num_groups=NUM_GROUPS):
    """Pure-JAX f32 reference mirroring the PyTorch Bottleneck (for validation)."""
    x = jnp.transpose(x_nchw, (0, 2, 3, 1))

    def gn(y, gamma, beta):
        n, h, w, c = y.shape
        yg = y.reshape(n, h * w, num_groups, c // num_groups)
        mean = yg.mean(axis=(1, 3), keepdims=True)
        var = yg.var(axis=(1, 3), keepdims=True)
        yn = ((yg - mean) / jnp.sqrt(var + EPS)).reshape(n, h, w, c)
        return yn * gamma + beta

    out = jax.nn.relu(gn(jnp.einsum("nhwc,cd->nhwd", x, params["w1"]),
                         params["g1"], params["b1"]))
    out = jax.lax.conv_general_dilated(out, params["w2"], (1, 1), "SAME",
                                       dimension_numbers=("NHWC", "HWIO", "NHWC"))
    out = jax.nn.relu(gn(out, params["g2"], params["b2"]))
    out = gn(jnp.einsum("nhwc,cd->nhwd", out, params["w3"]), params["g3"], params["b3"])
    if params.get("wd") is not None:
        ident = gn(jnp.einsum("nhwc,cd->nhwd", x, params["wd"]), params["gd"], params["bd"])
    else:
        ident = x
    return jnp.transpose(jax.nn.relu(out + ident), (0, 3, 1, 2))


if __name__ == "__main__":
    # GroupNorm(16, C) requires C % 16 == 0 -> inplanes=planes=16, expansion=4, H=W=8.
    N, inplanes, planes, H, W = 2, 16, 16, 8, 8
    key = jax.random.PRNGKey(0)
    kx, kp = jax.random.split(key)
    x = jax.random.normal(kx, (N, inplanes, H, W), jnp.float32)   # NCHW (PyTorch layout)
    params = init_params(kp, inplanes, planes)

    fwd = jax.jit(bottleneck_forward)
    y = jax.block_until_ready(fwd(x, params))

    assert y.shape == (N, planes * 4, H, W)
    assert bool(jnp.all(y >= 0.0))                                 # final ReLU
    # Loose tolerance: kernels use bf16 MXU operands (f32 accumulation / GN stats).
    ref = _reference_forward(x, params)
    max_err = float(jnp.max(jnp.abs(y - ref)))
    assert max_err < 0.3, f"max abs err vs reference too large: {max_err}"
    print("KERNEL_OK")
</pallas_src>

<mosaic_0001>
module attributes {stable_mosaic.version = 11 : i64} {
  func.func @_matmul_gn_kernel(%arg0: i32, %arg1: memref<1x64x16xbf16, #tpu.memory_space<vmem>>, %arg2: memref<16x16xbf16, #tpu.memory_space<vmem>>, %arg3: memref<1x16xf32, #tpu.memory_space<vmem>>, %arg4: memref<1x16xf32, #tpu.memory_space<vmem>>, %arg5: memref<16x16xf32, #tpu.memory_space<vmem>>, %arg6: memref<1x64x16xbf16, #tpu.memory_space<vmem>>) attributes {dimension_semantics = [#tpu.dimension_semantics<parallel>], iteration_bounds = array<i64: 2>, scalar_prefetch = 0 : i64, scratch_operands = 0 : i64, tpu.core_type = #tpu.core_type<tc>, window_params = [{transform_indices = @transform_0, window_bounds = array<i64: 1, 64, 16>}, {pipeline_mode = #tpu.pipeline_mode<synchronous>, transform_indices = @transform_1, window_bounds = array<i64: 16, 16>}, {pipeline_mode = #tpu.pipeline_mode<synchronous>, transform_indices = @transform_2, window_bounds = array<i64: 1, 16>}, {pipeline_mode = #tpu.pipeline_mode<synchronous>, transform_indices = @transform_3, window_bounds = array<i64: 1, 16>}, {pipeline_mode = #tpu.pipeline_mode<synchronous>, transform_indices = @transform_4, window_bounds = array<i64: 16, 16>}, {transform_indices = @transform_5, window_bounds = array<i64: 1, 64, 16>}]} {
    %c0 = arith.constant 0 : index
    %c0_0 = arith.constant 0 : index
    %c0_1 = arith.constant 0 : index
    %0 = vector.load %arg1[%c0, %c0_0, %c0_1] : memref<1x64x16xbf16, #tpu.memory_space<vmem>>, vector<1x64x16xbf16>
    %1 = vector.shape_cast %0 : vector<1x64x16xbf16> to vector<64x16xbf16>
    %c0_2 = arith.constant 0 : index
    %c0_3 = arith.constant 0 : index
    %2 = vector.load %arg2[%c0_2, %c0_3] : memref<16x16xbf16, #tpu.memory_space<vmem>>, vector<16x16xbf16>
    %cst = arith.constant dense<0.000000e+00> : vector<64x16xf32>
    %3 = tpu.matmul %1, %2, %cst {dimension_numbers = #tpu.dot_dimension_numbers<[1], [0], [0], [1], [0, 0, 1, 1], [], []>} : vector<64x16xbf16>, vector<16x16xbf16>, vector<64x16xf32> -> vector<64x16xf32>
    %c0_4 = arith.constant 0 : index
    %c0_5 = arith.constant 0 : index
    %4 = vector.load %arg3[%c0_4, %c0_5] : memref<1x16xf32, #tpu.memory_space<vmem>>, vector<1x16xf32>
    %c0_6 = arith.constant 0 : index
    %c0_7 = arith.constant 0 : index
    %5 = vector.load %arg4[%c0_6, %c0_7] : memref<1x16xf32, #tpu.memory_space<vmem>>, vector<1x16xf32>
    %c0_8 = arith.constant 0 : index
    %c0_9 = arith.constant 0 : index
    %6 = vector.load %arg5[%c0_8, %c0_9] : memref<16x16xf32, #tpu.memory_space<vmem>>, vector<16x16xf32>
    %cst_10 = arith.constant dense<0.000000e+00> : vector<16xf32>
    %7 = vector.multi_reduction <add>, %3, %cst_10 [0] : vector<64x16xf32> to vector<16xf32>
    %8 = vector.shape_cast %7 : vector<16xf32> to vector<1x16xf32>
    %9 = arith.mulf %3, %3 : vector<64x16xf32>
    %cst_11 = arith.constant dense<0.000000e+00> : vector<16xf32>
    %10 = vector.multi_reduction <add>, %9, %cst_11 [0] : vector<64x16xf32> to vector<16xf32>
    %11 = vector.shape_cast %10 : vector<16xf32> to vector<1x16xf32>
    %cst_12 = arith.constant dense<0.000000e+00> : vector<1x16xf32>
    %12 = tpu.matmul %8, %6, %cst_12 {dimension_numbers = #tpu.dot_dimension_numbers<[1], [0], [0], [1], [0, 0, 1, 1], [], []>} : vector<1x16xf32>, vector<16x16xf32>, vector<1x16xf32> -> vector<1x16xf32>
    %cst_13 = arith.constant 6.400000e+01 : f32
    %13 = vector.broadcast %cst_13 : f32 to vector<1x16xf32>
    %14 = arith.divf %12, %13 : vector<1x16xf32>
    %cst_14 = arith.constant dense<0.000000e+00> : vector<1x16xf32>
    %15 = tpu.matmul %11, %6, %cst_14 {dimension_numbers = #tpu.dot_dimension_numbers<[1], [0], [0], [1], [0, 0, 1, 1], [], []>} : vector<1x16xf32>, vector<16x16xf32>, vector<1x16xf32> -> vector<1x16xf32>
    %cst_15 = arith.constant 6.400000e+01 : f32
    %16 = vector.broadcast %cst_15 : f32 to vector<1x16xf32>
    %17 = arith.divf %15, %16 : vector<1x16xf32>
    %18 = arith.mulf %14, %14 : vector<1x16xf32>
    %19 = arith.subf %17, %18 : vector<1x16xf32>
    %cst_16 = arith.constant 9.99999974E-6 : f32
    %20 = vector.broadcast %cst_16 : f32 to vector<1x16xf32>
    %21 = arith.addf %19, %20 : vector<1x16xf32>
    %22 = math.rsqrt %21 : vector<1x16xf32>
    %23 = vector.broadcast %14 : vector<1x16xf32> to vector<64x16xf32>
    %24 = arith.subf %3, %23 : vector<64x16xf32>
    %25 = vector.broadcast %22 : vector<1x16xf32> to vector<64x16xf32>
    %26 = arith.mulf %24, %25 : vector<64x16xf32>
    %27 = vector.broadcast %4 : vector<1x16xf32> to vector<64x16xf32>
    %28 = arith.mulf %26, %27 : vector<64x16xf32>
    %29 = vector.broadcast %5 : vector<1x16xf32> to vector<64x16xf32>
    %30 = arith.addf %28, %29 : vector<64x16xf32>
    %cst_17 = arith.constant 0.000000e+00 : f32
    %31 = vector.broadcast %cst_17 : f32 to vector<64x16xf32>
    %32 = arith.maximumf %30, %31 : vector<64x16xf32>
    %33 = arith.truncf %32 : vector<64x16xf32> to vector<64x16xbf16>
    %c0_18 = arith.constant 0 : index
    %c0_19 = arith.constant 0 : index
    %c0_20 = arith.constant 0 : index
    %34 = vector.load %arg6[%c0_18, %c0_19, %c0_20] : memref<1x64x16xbf16, #tpu.memory_space<vmem>>, vector<1x64x16xbf16>
    %35 = vector.shape_cast %34 : vector<1x64x16xbf16> to vector<64x16xbf16>
    %36 = vector.shape_cast %33 : vector<64x16xbf16> to vector<1x64x16xbf16>
    tpu.vector_store %arg6[%c0_18, %c0_19, %c0_20], %36 {strides = array<i32>} : memref<1x64x16xbf16, #tpu.memory_space<vmem>>, vector<1x64x16xbf16>,
    return
  }
  func.func @transform_0(%arg0: i32) -> (i32, i32, i32) {
    %c0_i32 = arith.constant 0 : i32
    %c0_i32_0 = arith.constant 0 : i32
    %c0_i32_1 = arith.constant 0 : i32
    return %arg0, %c0_i32, %c0_i32_0 : i32, i32, i32
  }
  func.func @transform_1(%arg0: i32) -> (i32, i32) {
    %c0_i32 = arith.constant 0 : i32
    %c0_i32_0 = arith.constant 0 : i32
    %c0_i32_1 = arith.constant 0 : i32
    return %c0_i32, %c0_i32_0 : i32, i32
  }
  func.func @transform_2(%arg0: i32) -> (i32, i32) {
    %c0_i32 = arith.constant 0 : i32
    %c0_i32_0 = arith.constant 0 : i32
    %c0_i32_1 = arith.constant 0 : i32
    return %c0_i32, %c0_i32_0 : i32, i32
  }
  func.func @transform_3(%arg0: i32) -> (i32, i32) {
    %c0_i32 = arith.constant 0 : i32
    %c0_i32_0 = arith.constant 0 : i32
    %c0_i32_1 = arith.constant 0 : i32
    return %c0_i32, %c0_i32_0 : i32, i32
  }
  func.func @transform_4(%arg0: i32) -> (i32, i32) {
    %c0_i32 = arith.constant 0 : i32
    %c0_i32_0 = arith.constant 0 : i32
    %c0_i32_1 = arith.constant 0 : i32
    return %c0_i32, %c0_i32_0 : i32, i32
  }
  func.func @transform_5(%arg0: i32) -> (i32, i32, i32) {
    %c0_i32 = arith.constant 0 : i32
    %c0_i32_0 = arith.constant 0 : i32
    %c0_i32_1 = arith.constant 0 : i32
    return %arg0, %c0_i32, %c0_i32_0 : i32, i32, i32
  }
}

module attributes {stable_mosaic.version = 11 : i64} {
  func.func @_matmul_gn_kernel(%arg0: i32, %arg1: memref<1x64x144xbf16, #tpu.memory_space<vmem>>, %arg2: memref<144x16xbf16, #tpu.memory_space<vmem>>, %arg3: memref<1x16xf32, #tpu.memory_space<vmem>>, %arg4: memref<1x16xf32, #tpu.memory_space<vmem>>, %arg5: memref<16x16xf32, #tpu.memory_space<vmem>>, %arg6: memref<1x64x16xbf16, #tpu.memory_space<vmem>>) attributes {dimension_semantics = [#tpu.dimension_semantics<parallel>], iteration_bounds = array<i64: 2>, scalar_prefetch = 0 : i64, scratch_operands = 0 : i64, tpu.core_type = #tpu.core_type<tc>, window_params = [{transform_indices = @transform_0, window_bounds = array<i64: 1, 64, 144>}, {pipeline_mode = #tpu.pipeline_mode<synchronous>, transform_indices = @transform_1, window_bounds = array<i64: 144, 16>}, {pipeline_mode = #tpu.pipeline_mode<synchronous>, transform_indices = @transform_2, window_bounds = array<i64: 1, 16>}, {pipeline_mode = #tpu.pipeline_mode<synchronous>, transform_indices = @transform_3, window_bounds = array<i64: 1, 16>}, {pipeline_mode = #tpu.pipeline_mode<synchronous>, transform_indices = @transform_4, window_bounds = array<i64: 16, 16>}, {transform_indices = @transform_5, window_bounds = array<i64: 1, 64, 16>}]} {
    %c0 = arith.constant 0 : index
    %c0_0 = arith.constant 0 : index
    %c0_1 = arith.constant 0 : index
    %0 = vector.load %arg1[%c0, %c0_0, %c0_1] : memref<1x64x144xbf16, #tpu.memory_space<vmem>>, vector<1x64x144xbf16>
    %1 = vector.shape_cast %0 : vector<1x64x144xbf16> to vector<64x144xbf16>
    %c0_2 = arith.constant 0 : index
    %c0_3 = arith.constant 0 : index
    %2 = vector.load %arg2[%c0_2, %c0_3] : memref<144x16xbf16, #tpu.memory_space<vmem>>, vector<144x16xbf16>
    %cst = arith.constant dense<0.000000e+00> : vector<64x16xf32>
    %3 = tpu.matmul %1, %2, %cst {dimension_numbers = #tpu.dot_dimension_numbers<[1], [0], [0], [1], [0, 0, 1, 1], [], []>} : vector<64x144xbf16>, vector<144x16xbf16>, vector<64x16xf32> -> vector<64x16xf32>
    %c0_4 = arith.constant 0 : index
    %c0_5 = arith.constant 0 : index
    %4 = vector.load %arg3[%c0_4, %c0_5] : memref<1x16xf32, #tpu.memory_space<vmem>>, vector<1x16xf32>
    %c0_6 = arith.constant 0 : index
    %c0_7 = arith.constant 0 : index
    %5 = vector.load %arg4[%c0_6, %c0_7] : memref<1x16xf32, #tpu.memory_space<vmem>>, vector<1x16xf32>
    %c0_8 = arith.constant 0 : index
    %c0_9 = arith.constant 0 : index
    %6 = vector.load %arg5[%c0_8, %c0_9] : memref<16x16xf32, #tpu.memory_space<vmem>>, vector<16x16xf32>
    %cst_10 = arith.constant dense<0.000000e+00> : vector<16xf32>
    %7 = vector.multi_reduction <add>, %3, %cst_10 [0] : vector<64x16xf32> to vector<16xf32>
    %8 = vector.shape_cast %7 : vector<16xf32> to vector<1x16xf32>
    %9 = arith.mulf %3, %3 : vector<64x16xf32>
    %cst_11 = arith.constant dense<0.000000e+00> : vector<16xf32>
    %10 = vector.multi_reduction <add>, %9, %cst_11 [0] : vector<64x16xf32> to vector<16xf32>
    %11 = vector.shape_cast %10 : vector<16xf32> to vector<1x16xf32>
    %cst_12 = arith.constant dense<0.000000e+00> : vector<1x16xf32>
    %12 = tpu.matmul %8, %6, %cst_12 {dimension_numbers = #tpu.dot_dimension_numbers<[1], [0], [0], [1], [0, 0, 1, 1], [], []>} : vector<1x16xf32>, vector<16x16xf32>, vector<1x16xf32> -> vector<1x16xf32>
    %cst_13 = arith.constant 6.400000e+01 : f32
    %13 = vector.broadcast %cst_13 : f32 to vector<1x16xf32>
    %14 = arith.divf %12, %13 : vector<1x16xf32>
    %cst_14 = arith.constant dense<0.000000e+00> : vector<1x16xf32>
    %15 = tpu.matmul %11, %6, %cst_14 {dimension_numbers = #tpu.dot_dimension_numbers<[1], [0], [0], [1], [0, 0, 1, 1], [], []>} : vector<1x16xf32>, vector<16x16xf32>, vector<1x16xf32> -> vector<1x16xf32>
    %cst_15 = arith.constant 6.400000e+01 : f32
    %16 = vector.broadcast %cst_15 : f32 to vector<1x16xf32>
    %17 = arith.divf %15, %16 : vector<1x16xf32>
    %18 = arith.mulf %14, %14 : vector<1x16xf32>
    %19 = arith.subf %17, %18 : vector<1x16xf32>
    %cst_16 = arith.constant 9.99999974E-6 : f32
    %20 = vector.broadcast %cst_16 : f32 to vector<1x16xf32>
    %21 = arith.addf %19, %20 : vector<1x16xf32>
    %22 = math.rsqrt %21 : vector<1x16xf32>
    %23 = vector.broadcast %14 : vector<1x16xf32> to vector<64x16xf32>
    %24 = arith.subf %3, %23 : vector<64x16xf32>
    %25 = vector.broadcast %22 : vector<1x16xf32> to vector<64x16xf32>
    %26 = arith.mulf %24, %25 : vector<64x16xf32>
    %27 = vector.broadcast %4 : vector<1x16xf32> to vector<64x16xf32>
    %28 = arith.mulf %26, %27 : vector<64x16xf32>
    %29 = vector.broadcast %5 : vector<1x16xf32> to vector<64x16xf32>
    %30 = arith.addf %28, %29 : vector<64x16xf32>
    %cst_17 = arith.constant 0.000000e+00 : f32
    %31 = vector.broadcast %cst_17 : f32 to vector<64x16xf32>
    %32 = arith.maximumf %30, %31 : vector<64x16xf32>
    %33 = arith.truncf %32 : vector<64x16xf32> to vector<64x16xbf16>
    %c0_18 = arith.constant 0 : index
    %c0_19 = arith.constant 0 : index
    %c0_20 = arith.constant 0 : index
    %34 = vector.load %arg6[%c0_18, %c0_19, %c0_20] : memref<1x64x16xbf16, #tpu.memory_space<vmem>>, vector<1x64x16xbf16>
    %35 = vector.shape_cast %34 : vector<1x64x16xbf16> to vector<64x16xbf16>
    %36 = vector.shape_cast %33 : vector<64x16xbf16> to vector<1x64x16xbf16>
    tpu.vector_store %arg6[%c0_18, %c0_19, %c0_20], %36 {strides = array<i32>} : memref<1x64x16xbf16, #tpu.memory_space<vmem>>, vector<1x64x16xbf16>,
    return
  }
  func.func @transform_0(%arg0: i32) -> (i32, i32, i32) {
    %c0_i32 = arith.constant 0 : i32
    %c0_i32_0 = arith.constant 0 : i32
    %c0_i32_1 = arith.constant 0 : i32
    return %arg0, %c0_i32, %c0_i32_0 : i32, i32, i32
  }
  func.func @transform_1(%arg0: i32) -> (i32, i32) {
    %c0_i32 = arith.constant 0 : i32
    %c0_i32_0 = arith.constant 0 : i32
    %c0_i32_1 = arith.constant 0 : i32
    return %c0_i32, %c0_i32_0 : i32, i32
  }
  func.func @transform_2(%arg0: i32) -> (i32, i32) {
    %c0_i32 = arith.constant 0 : i32
    %c0_i32_0 = arith.constant 0 : i32
    %c0_i32_1 = arith.constant 0 : i32
    return %c0_i32, %c0_i32_0 : i32, i32
  }
  func.func @transform_3(%arg0: i32) -> (i32, i32) {
    %c0_i32 = arith.constant 0 : i32
    %c0_i32_0 = arith.constant 0 : i32
    %c0_i32_1 = arith.constant 0 : i32
    return %c0_i32, %c0_i32_0 : i32, i32
  }
  func.func @transform_4(%arg0: i32) -> (i32, i32) {
    %c0_i32 = arith.constant 0 : i32
    %c0_i32_0 = arith.constant 0 : i32
    %c0_i32_1 = arith.constant 0 : i32
    return %c0_i32, %c0_i32_0 : i32, i32
  }
  func.func @transform_5(%arg0: i32) -> (i32, i32, i32) {
    %c0_i32 = arith.constant 0 : i32
    %c0_i32_0 = arith.constant 0 : i32
    %c0_i32_1 = arith.constant 0 : i32
    return %arg0, %c0_i32, %c0_i32_0 : i32, i32, i32
  }
}

module attributes {stable_mosaic.version = 11 : i64} {
  func.func @_final_ds_kernel(%arg0: i32, %arg1: memref<1x64x16xbf16, #tpu.memory_space<vmem>>, %arg2: memref<1x64x16xbf16, #tpu.memory_space<vmem>>, %arg3: memref<16x64xbf16, #tpu.memory_space<vmem>>, %arg4: memref<16x64xbf16, #tpu.memory_space<vmem>>, %arg5: memref<1x64xf32, #tpu.memory_space<vmem>>, %arg6: memref<1x64xf32, #tpu.memory_space<vmem>>, %arg7: memref<1x64xf32, #tpu.memory_space<vmem>>, %arg8: memref<1x64xf32, #tpu.memory_space<vmem>>, %arg9: memref<64x64xf32, #tpu.memory_space<vmem>>, %arg10: memref<1x64x64xf32, #tpu.memory_space<vmem>>) attributes {dimension_semantics = [#tpu.dimension_semantics<parallel>], iteration_bounds = array<i64: 2>, scalar_prefetch = 0 : i64, scratch_operands = 0 : i64, tpu.core_type = #tpu.core_type<tc>, window_params = [{transform_indices = @transform_0, window_bounds = array<i64: 1, 64, 16>}, {transform_indices = @transform_1, window_bounds = array<i64: 1, 64, 16>}, {pipeline_mode = #tpu.pipeline_mode<synchronous>, transform_indices = @transform_2, window_bounds = array<i64: 16, 64>}, {pipeline_mode = #tpu.pipeline_mode<synchronous>, transform_indices = @transform_3, window_bounds = array<i64: 16, 64>}, {pipeline_mode = #tpu.pipeline_mode<synchronous>, transform_indices = @transform_4, window_bounds = array<i64: 1, 64>}, {pipeline_mode = #tpu.pipeline_mode<synchronous>, transform_indices = @transform_5, window_bounds = array<i64: 1, 64>}, {pipeline_mode = #tpu.pipeline_mode<synchronous>, transform_indices = @transform_6, window_bounds = array<i64: 1, 64>}, {pipeline_mode = #tpu.pipeline_mode<synchronous>, transform_indices = @transform_7, window_bounds = array<i64: 1, 64>}, {pipeline_mode = #tpu.pipeline_mode<synchronous>, transform_indices = @transform_8, window_bounds = array<i64: 64, 64>}, {transform_indices = @transform_9, window_bounds = array<i64: 1, 64, 64>}]} {
    %c0 = arith.constant 0 : index
    %c0_0 = arith.constant 0 : index
    %c0_1 = arith.constant 0 : index
    %0 = vector.load %arg1[%c0, %c0_0, %c0_1] : memref<1x64x16xbf16, #tpu.memory_space<vmem>>, vector<1x64x16xbf16>
    %1 = vector.shape_cast %0 : vector<1x64x16xbf16> to vector<64x16xbf16>
    %c0_2 = arith.constant 0 : index
    %c0_3 = arith.constant 0 : index
    %2 = vector.load %arg3[%c0_2, %c0_3] : memref<16x64xbf16, #tpu.memory_space<vmem>>, vector<16x64xbf16>
    %cst = arith.constant dense<0.000000e+00> : vector<64x64xf32>
    %3 = tpu.matmul %1, %2, %cst {dimension_numbers = #tpu.dot_dimension_numbers<[1], [0], [0], [1], [0, 0, 1, 1], [], []>} : vector<64x16xbf16>, vector<16x64xbf16>, vector<64x64xf32> -> vector<64x64xf32>
    %c0_4 = arith.constant 0 : index
    %c0_5 = arith.constant 0 : index
    %4 = vector.load %arg5[%c0_4, %c0_5] : memref<1x64xf32, #tpu.memory_space<vmem>>, vector<1x64xf32>
    %c0_6 = arith.constant 0 : index
    %c0_7 = arith.constant 0 : index
    %5 = vector.load %arg6[%c0_6, %c0_7] : memref<1x64xf32, #tpu.memory_space<vmem>>, vector<1x64xf32>
    %c0_8 = arith.constant 0 : index
    %c0_9 = arith.constant 0 : index
    %6 = vector.load %arg9[%c0_8, %c0_9] : memref<64x64xf32, #tpu.memory_space<vmem>>, vector<64x64xf32>
    %cst_10 = arith.constant dense<0.000000e+00> : vector<64xf32>
    %7 = vector.multi_reduction <add>, %3, %cst_10 [0] : vector<64x64xf32> to vector<64xf32>
    %8 = vector.shape_cast %7 : vector<64xf32> to vector<1x64xf32>
    %9 = arith.mulf %3, %3 : vector<64x64xf32>
    %cst_11 = arith.constant dense<0.000000e+00> : vector<64xf32>
    %10 = vector.multi_reduction <add>, %9, %cst_11 [0] : vector<64x64xf32> to vector<64xf32>
    %11 = vector.shape_cast %10 : vector<64xf32> to vector<1x64xf32>
    %cst_12 = arith.constant dense<0.000000e+00> : vector<1x64xf32>
    %12 = tpu.matmul %8, %6, %cst_12 {dimension_numbers = #tpu.dot_dimension_numbers<[1], [0], [0], [1], [0, 0, 1, 1], [], []>} : vector<1x64xf32>, vector<64x64xf32>, vector<1x64xf32> -> vector<1x64xf32>
    %cst_13 = arith.constant 2.560000e+02 : f32
    %13 = vector.broadcast %cst_13 : f32 to vector<1x64xf32>
    %14 = arith.divf %12, %13 : vector<1x64xf32>
    %cst_14 = arith.constant dense<0.000000e+00> : vector<1x64xf32>
    %15 = tpu.matmul %11, %6, %cst_14 {dimension_numbers = #tpu.dot_dimension_numbers<[1], [0], [0], [1], [0, 0, 1, 1], [], []>} : vector<1x64xf32>, vector<64x64xf32>, vector<1x64xf32> -> vector<1x64xf32>
    %cst_15 = arith.constant 2.560000e+02 : f32
    %16 = vector.broadcast %cst_15 : f32 to vector<1x64xf32>
    %17 = arith.divf %15, %16 : vector<1x64xf32>
    %18 = arith.mulf %14, %14 : vector<1x64xf32>
    %19 = arith.subf %17, %18 : vector<1x64xf32>
    %cst_16 = arith.constant 9.99999974E-6 : f32
    %20 = vector.broadcast %cst_16 : f32 to vector<1x64xf32>
    %21 = arith.addf %19, %20 : vector<1x64xf32>
    %22 = math.rsqrt %21 : vector<1x64xf32>
    %23 = vector.broadcast %14 : vector<1x64xf32> to vector<64x64xf32>
    %24 = arith.subf %3, %23 : vector<64x64xf32>
    %25 = vector.broadcast %22 : vector<1x64xf32> to vector<64x64xf32>
    %26 = arith.mulf %24, %25 : vector<64x64xf32>
    %27 = vector.broadcast %4 : vector<1x64xf32> to vector<64x64xf32>
    %28 = arith.mulf %26, %27 : vector<64x64xf32>
    %29 = vector.broadcast %5 : vector<1x64xf32> to vector<64x64xf32>
    %30 = arith.addf %28, %29 : vector<64x64xf32>
    %c0_17 = arith.constant 0 : index
    %c0_18 = arith.constant 0 : index
    %c0_19 = arith.constant 0 : index
    %31 = vector.load %arg2[%c0_17, %c0_18, %c0_19] : memref<1x64x16xbf16, #tpu.memory_space<vmem>>, vector<1x64x16xbf16>
    %32 = vector.shape_cast %31 : vector<1x64x16xbf16> to vector<64x16xbf16>
    %c0_20 = arith.constant 0 : index
    %c0_21 = arith.constant 0 : index
    %33 = vector.load %arg4[%c0_20, %c0_21] : memref<16x64xbf16, #tpu.memory_space<vmem>>, vector<16x64xbf16>
    %cst_22 = arith.constant dense<0.000000e+00> : vector<64x64xf32>
    %34 = tpu.matmul %32, %33, %cst_22 {dimension_numbers = #tpu.dot_dimension_numbers<[1], [0], [0], [1], [0, 0, 1, 1], [], []>} : vector<64x16xbf16>, vector<16x64xbf16>, vector<64x64xf32> -> vector<64x64xf32>
    %c0_23 = arith.constant 0 : index
    %c0_24 = arith.constant 0 : index
    %35 = vector.load %arg7[%c0_23, %c0_24] : memref<1x64xf32, #tpu.memory_space<vmem>>, vector<1x64xf32>
    %c0_25 = arith.constant 0 : index
    %c0_26 = arith.constant 0 : index
    %36 = vector.load %arg8[%c0_25, %c0_26] : memref<1x64xf32, #tpu.memory_space<vmem>>, vector<1x64xf32>
    %c0_27 = arith.constant 0 : index
    %c0_28 = arith.constant 0 : index
    %37 = vector.load %arg9[%c0_27, %c0_28] : memref<64x64xf32, #tpu.memory_space<vmem>>, vector<64x64xf32>
    %cst_29 = arith.constant dense<0.000000e+00> : vector<64xf32>
    %38 = vector.multi_reduction <add>, %34, %cst_29 [0] : vector<64x64xf32> to vector<64xf32>
    %39 = vector.shape_cast %38 : vector<64xf32> to vector<1x64xf32>
    %40 = arith.mulf %34, %34 : vector<64x64xf32>
    %cst_30 = arith.constant dense<0.000000e+00> : vector<64xf32>
    %41 = vector.multi_reduction <add>, %40, %cst_30 [0] : vector<64x64xf32> to vector<64xf32>
    %42 = vector.shape_cast %41 : vector<64xf32> to vector<1x64xf32>
    %cst_31 = arith.constant dense<0.000000e+00> : vector<1x64xf32>
    %43 = tpu.matmul %39, %37, %cst_31 {dimension_numbers = #tpu.dot_dimension_numbers<[1], [0], [0], [1], [0, 0, 1, 1], [], []>} : vector<1x64xf32>, vector<64x64xf32>, vector<1x64xf32> -> vector<1x64xf32>
    %cst_32 = arith.constant 2.560000e+02 : f32
    %44 = vector.broadcast %cst_32 : f32 to vector<1x64xf32>
    %45 = arith.divf %43, %44 : vector<1x64xf32>
    %cst_33 = arith.constant dense<0.000000e+00> : vector<1x64xf32>
    %46 = tpu.matmul %42, %37, %cst_33 {dimension_numbers = #tpu.dot_dimension_numbers<[1], [0], [0], [1], [0, 0, 1, 1], [], []>} : vector<1x64xf32>, vector<64x64xf32>, vector<1x64xf32> -> vector<1x64xf32>
    %cst_34 = arith.constant 2.560000e+02 : f32
    %47 = vector.broadcast %cst_34 : f32 to vector<1x64xf32>
    %48 = arith.divf %46, %47 : vector<1x64xf32>
    %49 = arith.mulf %45, %45 : vector<1x64xf32>
    %50 = arith.subf %48, %49 : vector<1x64xf32>
    %cst_35 = arith.constant 9.99999974E-6 : f32
    %51 = vector.broadcast %cst_35 : f32 to vector<1x64xf32>
    %52 = arith.addf %50, %51 : vector<1x64xf32>
    %53 = math.rsqrt %52 : vector<1x64xf32>
    %54 = vector.broadcast %45 : vector<1x64xf32> to vector<64x64xf32>
    %55 = arith.subf %34, %54 : vector<64x64xf32>
    %56 = vector.broadcast %53 : vector<1x64xf32> to vector<64x64xf32>
    %57 = arith.mulf %55, %56 : vector<64x64xf32>
    %58 = vector.broadcast %35 : vector<1x64xf32> to vector<64x64xf32>
    %59 = arith.mulf %57, %58 : vector<64x64xf32>
    %60 = vector.broadcast %36 : vector<1x64xf32> to vector<64x64xf32>
    %61 = arith.addf %59, %60 : vector<64x64xf32>
    %62 = arith.addf %30, %61 : vector<64x64xf32>
    %cst_36 = arith.constant 0.000000e+00 : f32
    %63 = vector.broadcast %cst_36 : f32 to vector<64x64xf32>
    %64 = arith.maximumf %62, %63 : vector<64x64xf32>
    %c0_37 = arith.constant 0 : index
    %c0_38 = arith.constant 0 : index
    %c0_39 = arith.constant 0 : index
    %65 = vector.load %arg10[%c0_37, %c0_38, %c0_39] : memref<1x64x64xf32, #tpu.memory_space<vmem>>, vector<1x64x64xf32>
    %66 = vector.shape_cast %65 : vector<1x64x64xf32> to vector<64x64xf32>
    %67 = vector.shape_cast %64 : vector<64x64xf32> to vector<1x64x64xf32>
    tpu.vector_store %arg10[%c0_37, %c0_38, %c0_39], %67 {strides = array<i32>} : memref<1x64x64xf32, #tpu.memory_space<vmem>>, vector<1x64x64xf32>,
    return
  }
  func.func @transform_0(%arg0: i32) -> (i32, i32, i32) {
    %c0_i32 = arith.constant 0 : i32
    %c0_i32_0 = arith.constant 0 : i32
    %c0_i32_1 = arith.constant 0 : i32
    return %arg0, %c0_i32, %c0_i32_0 : i32, i32, i32
  }
  func.func @transform_1(%arg0: i32) -> (i32, i32, i32) {
    %c0_i32 = arith.constant 0 : i32
    %c0_i32_0 = arith.constant 0 : i32
    %c0_i32_1 = arith.constant 0 : i32
    return %arg0, %c0_i32, %c0_i32_0 : i32, i32, i32
  }
  func.func @transform_2(%arg0: i32) -> (i32, i32) {
    %c0_i32 = arith.constant 0 : i32
    %c0_i32_0 = arith.constant 0 : i32
    %c0_i32_1 = arith.constant 0 : i32
    return %c0_i32, %c0_i32_0 : i32, i32
  }
  func.func @transform_3(%arg0: i32) -> (i32, i32) {
    %c0_i32 = arith.constant 0 : i32
    %c0_i32_0 = arith.constant 0 : i32
    %c0_i32_1 = arith.constant 0 : i32
    return %c0_i32, %c0_i32_0 : i32, i32
  }
  func.func @transform_4(%arg0: i32) -> (i32, i32) {
    %c0_i32 = arith.constant 0 : i32
    %c0_i32_0 = arith.constant 0 : i32
    %c0_i32_1 = arith.constant 0 : i32
    return %c0_i32, %c0_i32_0 : i32, i32
  }
  func.func @transform_5(%arg0: i32) -> (i32, i32) {
    %c0_i32 = arith.constant 0 : i32
    %c0_i32_0 = arith.constant 0 : i32
    %c0_i32_1 = arith.constant 0 : i32
    return %c0_i32, %c0_i32_0 : i32, i32
  }
  func.func @transform_6(%arg0: i32) -> (i32, i32) {
    %c0_i32 = arith.constant 0 : i32
    %c0_i32_0 = arith.constant 0 : i32
    %c0_i32_1 = arith.constant 0 : i32
    return %c0_i32, %c0_i32_0 : i32, i32
  }
  func.func @transform_7(%arg0: i32) -> (i32, i32) {
    %c0_i32 = arith.constant 0 : i32
    %c0_i32_0 = arith.constant 0 : i32
    %c0_i32_1 = arith.constant 0 : i32
    return %c0_i32, %c0_i32_0 : i32, i32
  }
  func.func @transform_8(%arg0: i32) -> (i32, i32) {
    %c0_i32 = arith.constant 0 : i32
    %c0_i32_0 = arith.constant 0 : i32
    %c0_i32_1 = arith.constant 0 : i32
    return %c0_i32, %c0_i32_0 : i32, i32
  }
  func.func @transform_9(%arg0: i32) -> (i32, i32, i32) {
    %c0_i32 = arith.constant 0 : i32
    %c0_i32_0 = arith.constant 0 : i32
    %c0_i32_1 = arith.constant 0 : i32
    return %arg0, %c0_i32, %c0_i32_0 : i32, i32, i32
  }
}

</mosaic_0001>

<llo_original>
// kernel: bottleneck_forward.3
$region0: #{bottleneck_forward.3}
  #allocation0 [shape = 'u32[]', space=smem, size = 0x4, offset = 0x4, fixed_abs, tag = 'smem constant byte address 0x4 - core index']
  #allocation1 [shape = 'u32[144,128]{1,0:T(1,128)}', space=vmem, size = 0x12000, scoped, tag = 'internal scratch']
  %s0 = inlined_call_operand.vmem [shape: bf16[2,64,16], index: 0, kind: input, shape index: {}]
  %s1 = inlined_call_operand.vmem [shape: bf16[16,16], index: 1, kind: input, shape index: {}]
  %s2 = inlined_call_operand.vmem [shape: f32[1,16], index: 2, kind: input, shape index: {}]
  %s3 = inlined_call_operand.vmem [shape: f32[1,16], index: 3, kind: input, shape index: {}]
  %s4 = inlined_call_operand.vmem [shape: f32[16,16], index: 4, kind: input, shape index: {}]
  %s5 = inlined_call_operand.vmem [shape: bf16[2,64,16], index: 5, kind: output, shape index: {}]
  %s6 = sld [smem:[#allocation0]]
  $region53: #{bottleneck_forward.3} parent=0
    _
  %s8 = ssub.s32 1, %s6
  %s9 = scalar_select 0, %s8, %s6
  loop: start=0, step=1, limit=4
  $region2: #{bottleneck_forward.3} parent=0 // loop_pre_header
    _
  $region3: #{bottleneck_forward.3} parent=0 // loop_header
    %s11 = sphi 0, %s15
    %p12 = scmp.ge.s32.totalorder %s11, 4
    %s21 = sphi 0, %s23
    %s24 = sphi 0, %s21
    %s25 = sphi 0, %s24
    %s41 = sphi 0, %s25
    %s45 = sphi 0, %s45
    %s47 = sphi 0, %s45
    %s48 = sphi 0, %s47
    %s62 = sphi 0, %s48
    %s66 = sphi 0, %s66
    %s68 = sphi 0, %s66
    %s69 = sphi 0, %s68
    %s83 = sphi 0, %s69
    %s87 = sphi 0, %s87
    %s89 = sphi 0, %s87
    %s90 = sphi 0, %s89
    %s104 = sphi 0, %s90
    %s108 = sphi 0, %s108
    %s110 = sphi 0, %s108
    %s111 = sphi 0, %s110
    %s125 = sphi 0, %s111
    %s131 = sphi 0, %s133
    %s134 = sphi 0, %s131
    %s135 = sphi 0, %s134
    %s151 = sphi 0, %s135
  $region4: #{bottleneck_forward.3} parent=0 // loop_header_branch
    %14 = sbr.rel (%p12) target = $region8
  $region5: #{bottleneck_forward.3} parent=0 // loop_body
    %s16 = ssub.s32 %s11, 1
    %s17 = ssub.s32 %s11, 2
    %s18 = sadd.s32 %s11, 1
    %s19 = ssub.s32 %s11, %s18
    %p20 = scmp.eq.s32.totalorder %s19, 0
    %s22 = sadd.s32 %s21, 1
    %s23 = scalar_select %p20, %s21, %s22
    %p26 = pneg %p20
    %p27 = scmp.eq.s32.totalorder %s11, 1
    %p28 = por %p26, %p27
    %p29 = scmp.ne.s32.totalorder %s21, %s24
    %p30 = scmp.eq.s32.totalorder %s11, 0
    %p31 = por %p29, %p30
    %p32 = scmp.ne.s32.totalorder %s21, %s24
    %p33 = scmp.eq.s32.totalorder %s16, 1
    %p34 = por %p32, %p33
    %p35 = scmp.ne.s32.totalorder %s24, %s25
    %p36 = scmp.eq.s32.totalorder %s16, 0
    %p37 = por %p35, %p36
    %p38 = scmp.ne.s32.totalorder %s24, %s25
    %p39 = scmp.eq.s32.totalorder %s17, 1
    %p40 = por %p38, %p39
    %p42 = scmp.ne.s32.totalorder %s25, %s41
    %p43 = scmp.eq.s32.totalorder %s17, 0
    %p44 = por %p42, %p43
    %s46 = sadd.s32 %s45, 1
    %p49 = scmp.eq.s32.totalorder %s11, 1
    %p50 = scmp.ne.s32.totalorder %s45, %s47
    %p51 = scmp.eq.s32.totalorder %s11, 0
    %p52 = por %p50, %p51
    %p53 = scmp.ne.s32.totalorder %s45, %s47
    %p54 = scmp.eq.s32.totalorder %s16, 1
    %p55 = por %p53, %p54
    %p56 = scmp.ne.s32.totalorder %s47, %s48
    %p57 = scmp.eq.s32.totalorder %s16, 0
    %p58 = por %p56, %p57
    %p59 = scmp.ne.s32.totalorder %s47, %s48
    %p60 = scmp.eq.s32.totalorder %s17, 1
    %p61 = por %p59, %p60
    %p63 = scmp.ne.s32.totalorder %s48, %s62
    %p64 = scmp.eq.s32.totalorder %s17, 0
    %p65 = por %p63, %p64
    %s67 = sadd.s32 %s66, 1
    %p70 = scmp.eq.s32.totalorder %s11, 1
    %p71 = scmp.ne.s32.totalorder %s66, %s68
    %p72 = scmp.eq.s32.totalorder %s11, 0
    %p73 = por %p71, %p72
    %p74 = scmp.ne.s32.totalorder %s66, %s68
    %p75 = scmp.eq.s32.totalorder %s16, 1
    %p76 = por %p74, %p75
    %p77 = scmp.ne.s32.totalorder %s68, %s69
    %p78 = scmp.eq.s32.totalorder %s16, 0
    %p79 = por %p77, %p78
    %p80 = scmp.ne.s32.totalorder %s68, %s69
    %p81 = scmp.eq.s32.totalorder %s17, 1
    %p82 = por %p80, %p81
    %p84 = scmp.ne.s32.totalorder %s69, %s83
    %p85 = scmp.eq.s32.totalorder %s17, 0
    %p86 = por %p84, %p85
    %s88 = sadd.s32 %s87, 1
    %p91 = scmp.eq.s32.totalorder %s11, 1
    %p92 = scmp.ne.s32.totalorder %s87, %s89
    %p93 = scmp.eq.s32.totalorder %s11, 0
    %p94 = por %p92, %p93
    %p95 = scmp.ne.s32.totalorder %s87, %s89
    %p96 = scmp.eq.s32.totalorder %s16, 1
    %p97 = por %p95, %p96
    %p98 = scmp.ne.s32.totalorder %s89, %s90
    %p99 = scmp.eq.s32.totalorder %s16, 0
    %p100 = por %p98, %p99
    %p101 = scmp.ne.s32.totalorder %s89, %s90
    %p102 = scmp.eq.s32.totalorder %s17, 1
    %p103 = por %p101, %p102
    %p105 = scmp.ne.s32.totalorder %s90, %s104
    %p106 = scmp.eq.s32.totalorder %s17, 0
    %p107 = por %p105, %p106
    %s109 = sadd.s32 %s108, 1
    %p112 = scmp.eq.s32.totalorder %s11, 1
    %p113 = scmp.ne.s32.totalorder %s108, %s110
    %p114 = scmp.eq.s32.totalorder %s11, 0
    %p115 = por %p113, %p114
    %p116 = scmp.ne.s32.totalorder %s108, %s110
    %p117 = scmp.eq.s32.totalorder %s16, 1
    %p118 = por %p116, %p117
    %p119 = scmp.ne.s32.totalorder %s110, %s111
    %p120 = scmp.eq.s32.totalorder %s16, 0
    %p121 = por %p119, %p120
    %p122 = scmp.ne.s32.totalorder %s110, %s111
    %p123 = scmp.eq.s32.totalorder %s17, 1
    %p124 = por %p122, %p123
    %p126 = scmp.ne.s32.totalorder %s111, %s125
    %p127 = scmp.eq.s32.totalorder %s17, 0
    %p128 = por %p126, %p127
    %s129 = ssub.s32 %s11, %s18
    %p130 = scmp.eq.s32.totalorder %s129, 0
    %s132 = sadd.s32 %s131, 1
    %s133 = scalar_select %p130, %s131, %s132
    %p136 = pneg %p130
    %p137 = scmp.eq.s32.totalorder %s11, 1
    %p138 = por %p136, %p137
    %p139 = scmp.ne.s32.totalorder %s131, %s134
    %p140 = scmp.eq.s32.totalorder %s11, 0
    %p141 = por %p139, %p140
    %p142 = scmp.ne.s32.totalorder %s131, %s134
    %p143 = scmp.eq.s32.totalorder %s16, 1
    %p144 = por %p142, %p143
    %p145 = scmp.ne.s32.totalorder %s134, %s135
    %p146 = scmp.eq.s32.totalorder %s16, 0
    %p147 = por %p145, %p146
    %p148 = scmp.ne.s32.totalorder %s134, %s135
    %p149 = scmp.eq.s32.totalorder %s17, 1
    %p150 = por %p148, %p149
    %p152 = scmp.ne.s32.totalorder %s135, %s151
    %p153 = scmp.eq.s32.totalorder %s17, 0
    %p154 = por %p152, %p153
    %p155 = scmp.le.s32.totalorder 1, %s11
    %p156 = scmp.lt.s32.totalorder %s11, 3
    %p157 = pnand %p155, %p156
    %p158 = pneg %p157
    // Predicated region
    $region9: #{bottleneck_forward.3} parent=5 // pred_check
      _
    $region10: #{bottleneck_forward.3} parent=5 // pred_check_branch
      %160 = sbr.rel (%p157) target = $region12
    $region11: #{bottleneck_forward.3} parent=5 // pred_region
      %s161 = ssub.s32 %s11, 1
      // Predicated region
      $region13: #{bottleneck_forward.3} parent=11 // pred_check
        %p162 = pneg %p58
      $region14: #{bottleneck_forward.3} parent=11 // pred_check_branch
        %164 = sbr.rel (%p162) target = $region16
      $region15: #{bottleneck_forward.3} parent=11 // pred_region
        _
      $region16: #{bottleneck_forward.3} parent=11 // pred_fallthru
        _
      // Predicated region
      $region17: #{bottleneck_forward.3} parent=11 // pred_check
        %p165 = pneg %p79
      $region18: #{bottleneck_forward.3} parent=11 // pred_check_branch
        %167 = sbr.rel (%p165) target = $region20
      $region19: #{bottleneck_forward.3} parent=11 // pred_region
        _
      $region20: #{bottleneck_forward.3} parent=11 // pred_fallthru
        _
      // Predicated region
      $region21: #{bottleneck_forward.3} parent=11 // pred_check
        %p168 = pneg %p100
      $region22: #{bottleneck_forward.3} parent=11 // pred_check_branch
        %170 = sbr.rel (%p168) target = $region24
      $region23: #{bottleneck_forward.3} parent=11 // pred_region
        _
      $region24: #{bottleneck_forward.3} parent=11 // pred_fallthru
        _
      // Predicated region
      $region25: #{bottleneck_forward.3} parent=11 // pred_check
        %p171 = pneg %p121
      $region26: #{bottleneck_forward.3} parent=11 // pred_check_branch
        %173 = sbr.rel (%p171) target = $region28
      $region27: #{bottleneck_forward.3} parent=11 // pred_region
        _
      $region28: #{bottleneck_forward.3} parent=11 // pred_fallthru
        _
    $region12: #{bottleneck_forward.3} parent=5 // pred_fallthru
      _
    %p174 = scmp.lt.s32.totalorder %s11, 2
    // Predicated region
    $region29: #{bottleneck_forward.3} parent=5 // pred_check
      %p175 = pneg %p174
    $region30: #{bottleneck_forward.3} parent=5 // pred_check_branch
      %177 = sbr.rel (%p175) target = $region32
    $region31: #{bottleneck_forward.3} parent=5 // pred_region
      // Predicated region
      $region33: #{bottleneck_forward.3} parent=31 // pred_check
        %p178 = pneg %p31
      $region34: #{bottleneck_forward.3} parent=31 // pred_check_branch
        %180 = sbr.rel (%p178) target = $region36
      $region35: #{bottleneck_forward.3} parent=31 // pred_region
        %p181 = scmp.lt.s32.totalorder %s11, 1
        %s182 = scalar_select %p181, %s11, 1
        %s183 = smul.addr %s182, 8
        %s184 = smul.addr %s183, 4
        %s185 = scalar_lea.vmem %s0, %s184
      $region36: #{bottleneck_forward.3} parent=31 // pred_fallthru
        _
    $region32: #{bottleneck_forward.3} parent=5 // pred_fallthru
      _
    %p186 = scmp.le.s32.totalorder 1, %s11
    %p187 = scmp.lt.s32.totalorder %s11, 3
    %p188 = pnand %p186, %p187
    %p189 = pneg %p188
    // Predicated region
    $region37: #{bottleneck_forward.3} parent=5 // pred_check
      _
    $region38: #{bottleneck_forward.3} parent=5 // pred_check_branch
      %191 = sbr.rel (%p188) target = $region40
    $region39: #{bottleneck_forward.3} parent=5 // pred_region
      %s192 = ssub.s32 %s11, 1
      %p193 = scmp.lt.s32.totalorder %s16, 1
      %s194 = scalar_select %p193, %s16, 1
      %s195 = smul.addr %s194, 8
      %s196 = smul.addr %s195, 4
      %s197 = scalar_lea.vmem %s0, %s196
      %p198 = pneg %p37
      %p199 = pneg %p34
      %p200 = pneg %p58
      %p201 = pneg %p55
      %p202 = pneg %p79
      %p203 = pneg %p76
      %p204 = pneg %p100
      %p205 = pneg %p97
      %p206 = pneg %p121
      %p207 = pneg %p118
      %p208 = pneg %p147
      %p209 = pneg %p144
      %p210 = scmp.lt.s32.totalorder %s16, 1
      %s211 = scalar_select %p210, %s16, 1
      %s212 = smul.addr %s211, 8
      %s213 = smul.addr %s212, 4
      %s214 = scalar_lea.vmem %s5, %s213
      %p215 = scmp.lt.s32.totalorder %s16, 1
      %s216 = scalar_select %p215, %s16, 1
      %s217 = smul.addr %s216, 8
      %s218 = smul.addr %s217, 4
      %s219 = scalar_lea.vmem %s0, %s218
      %p220 = scmp.lt.s32.totalorder %s16, 1
      %s221 = scalar_select %p220, %s16, 1
      %s222 = smul.addr %s221, 8
      %s223 = smul.addr %s222, 4
      %s224 = scalar_lea.vmem %s5, %s223
      %v226 = vld [vmem:[%s219] sm:$0xf]
      %v227 = vld [vmem:[%s219 + $0x4] sm:$0xf]
      %v228 = vld [vmem:[%s219 + $0x8] sm:$0xf]
      %v229 = vld [vmem:[%s219 + $0xc] sm:$0xf]
      %v230 = vld [vmem:[%s219 + $0x10] sm:$0xf]
      %v231 = vld [vmem:[%s219 + $0x14] sm:$0xf]
      %v232 = vld [vmem:[%s219 + $0x18] sm:$0xf]
      %v233 = vld [vmem:[%s219 + $0x1c] sm:$0xf]
      %v234 = vld [vmem:[%s1] sm:$0xf]
      %v235 = vld [vmem:[%s1 + $0x4] sm:$0xf]
      %v244 = vunpack.c.l.b16 %v226
      %v245 = vunpack.c.l.b16 %v227
      %v246 = vunpack.c.l.b16 %v228
      %v247 = vunpack.c.l.b16 %v229
      %v248 = vunpack.c.l.b16 %v230
      %v249 = vunpack.c.l.b16 %v231
      %v250 = vunpack.c.l.b16 %v232
      %v251 = vunpack.c.l.b16 %v233
      %v252 = vpack.c.b16 %v245, %v244
      %v253 = vpack.c.b16 %v247, %v246
      %v254 = vpack.c.b16 %v249, %v248
      %v255 = vpack.c.b16 %v251, %v250
      %v258 = vunpack.c.l.b16 %v234
      %v259 = vunpack.c.l.b16 %v235
      %v260 = vpack.c.b16 %v259, %v258
      %vm262 = vcmask 130048
      %v264 = vsel %vm262, %v252, 0
      %v267 = vsel %vm262, %v253, 0
      %v270 = vsel %vm262, %v254, 0
      %v273 = vsel %vm262, %v255, 0
      %275 = vmatprep.subr.bf16.mxu0 0
      %276 = vmatpush1.bf16.msra.mxu0 %v260
      %277 = vmatprep.subr.bf16.mxu0 0
      %278 = vmatpush1.bf16.msra.mxu0 0
      %279 = vmatprep.subr.bf16.mxu0 0
      %280 = vmatpush1.bf16.msra.mxu0 0
      %281 = vmatprep.subr.bf16.mxu0 0
      %282 = vmatpush1.bf16.msra.mxu0 0
      %283 = vmatprep.subr.bf16.mxu0 0
      %284 = vmatpush1.bf16.msra.mxu0 0
      %285 = vmatprep.subr.bf16.mxu0 0
      %286 = vmatpush1.bf16.msra.mxu0 0
      %287 = vmatprep.subr.bf16.mxu0 0
      %288 = vmatpush1.bf16.msra.mxu0 0
      %289 = vmatprep.subr.bf16.mxu0 0
      %290 = vmatpush1.bf16.msra.mxu0 0
      %291 = vmatprep.subr.bf16.mxu0 0
      %292 = vmatpush1.bf16.msra.mxu0 0
      %293 = vmatprep.subr.bf16.mxu0 0
      %294 = vmatpush1.bf16.msra.mxu0 0
      %295 = vmatprep.subr.bf16.mxu0 0
      %296 = vmatpush1.bf16.msra.mxu0 0
      %297 = vmatprep.subr.bf16.mxu0 0
      %298 = vmatpush1.bf16.msra.mxu0 0
      %299 = vmatprep.subr.bf16.mxu0 0
      %300 = vmatpush1.bf16.msra.mxu0 0
      %301 = vmatprep.subr.bf16.mxu0 0
      %302 = vmatpush1.bf16.msra.mxu0 0
      %303 = vmatprep.subr.bf16.mxu0 0
      %304 = vmatpush1.bf16.msra.mxu0 0
      %305 = vmatprep.subr.bf16.mxu0 0
      %306 = vmatpush1.bf16.msra.mxu0 0
      %307 = vmatprep.mubr.bf16.mxu0 0
      %308 = vmatmul.mubr.bf16.gmra.mrb[0].mxu0 %v264
      %v309 = vpop.f32.mrb[0].mxu0
      %v310 = vadd.f32 0.0, %v309
      %v311 = vpop.f32.mrb[0].mxu0
      %v312 = vpop.f32.mrb[0].mxu0
      %v313 = vadd.f32 0.0, %v312
      %v314 = vpop.f32.mrb[0].mxu0
      %315 = vmatprep.mubr.bf16.mxu0 0
      %316 = vmatmul.mubr.bf16.gmra.mrb[0].mxu0 %v267
      %v317 = vpop.f32.mrb[0].mxu0
      %v318 = vadd.f32 0.0, %v317
      %v319 = vpop.f32.mrb[0].mxu0
      %v320 = vpop.f32.mrb[0].mxu0
      %v321 = vadd.f32 0.0, %v320
      %v322 = vpop.f32.mrb[0].mxu0
      %323 = vmatprep.mubr.bf16.mxu0 0
      %324 = vmatmul.mubr.bf16.gmra.mrb[0].mxu0 %v270
      %v325 = vpop.f32.mrb[0].mxu0
      %v326 = vadd.f32 0.0, %v325
      %v327 = vpop.f32.mrb[0].mxu0
      %v328 = vpop.f32.mrb[0].mxu0
      %v329 = vadd.f32 0.0, %v328
      %v330 = vpop.f32.mrb[0].mxu0
      %331 = vmatprep.mubr.bf16.mxu0 0
      %332 = vmatmul.mubr.bf16.gmra.mrb[0].mxu0 %v273
      %v333 = vpop.f32.mrb[0].mxu0
      %v334 = vadd.f32 0.0, %v333
      %v335 = vpop.f32.mrb[0].mxu0
      %v336 = vpop.f32.mrb[0].mxu0
      %v337 = vadd.f32 0.0, %v336
      %v338 = vpop.f32.mrb[0].mxu0
      %339 = vdwg.mxu0
      %v340 = vld [vmem:[%s2] sm:$0x1]
      %v341 = vld [vmem:[%s3] sm:$0x1]
      %v342 = vld [vmem:[%s4] sm:$0xff]
      %v343 = vld [vmem:[%s4 + $0x8] sm:$0xff]
      %v344 = vsel %vm262, %v310, 0.0
      %v345 = vsel %vm262, %v313, 0.0
      %v346 = vadd.f32 %v344, %v345
      %v347 = vsel %vm262, %v318, 0.0
      %v348 = vadd.f32 %v346, %v347
      %v349 = vsel %vm262, %v321, 0.0
      %v350 = vadd.f32 %v348, %v349
      %v351 = vsel %vm262, %v326, 0.0
      %v352 = vadd.f32 %v350, %v351
      %v353 = vsel %vm262, %v329, 0.0
      %v354 = vadd.f32 %v352, %v353
      %v355 = vsel %vm262, %v334, 0.0
      %v356 = vadd.f32 %v354, %v355
      %v357 = vsel %vm262, %v337, 0.0
      %v358 = vadd.f32 %v356, %v357
      %v359 = vrot.slane %v358, 4
      %v360 = vadd.f32 %v358, %v359
      %v361 = vrot.slane %v360, 2
      %v362 = vadd.f32 %v360, %v361
      %v363 = vrot.slane %v362, 1
      %v364 = vadd.f32 %v362, %v363
      %v365 = vmul.f32 %v310, %v310
      %v366 = vmul.f32 %v313, %v313
      %v367 = vmul.f32 %v318, %v318
      %v368 = vmul.f32 %v321, %v321
      %v369 = vmul.f32 %v326, %v326
      %v370 = vmul.f32 %v329, %v329
      %v371 = vmul.f32 %v334, %v334
      %v372 = vmul.f32 %v337, %v337
      %v373 = vsel %vm262, %v365, 0.0
      %v374 = vsel %vm262, %v366, 0.0
      %v375 = vadd.f32 %v373, %v374
      %v376 = vsel %vm262, %v367, 0.0
      %v377 = vadd.f32 %v375, %v376
      %v378 = vsel %vm262, %v368, 0.0
      %v379 = vadd.f32 %v377, %v378
      %v380 = vsel %vm262, %v369, 0.0
      %v381 = vadd.f32 %v379, %v380
      %v382 = vsel %vm262, %v370, 0.0
      %v383 = vadd.f32 %v381, %v382
      %v384 = vsel %vm262, %v371, 0.0
      %v385 = vadd.f32 %v383, %v384
      %v386 = vsel %vm262, %v372, 0.0
      %v387 = vadd.f32 %v385, %v386
      %v388 = vrot.slane %v387, 4
      %v389 = vadd.f32 %v387, %v388
      %v390 = vrot.slane %v389, 2
      %v391 = vadd.f32 %v389, %v390
      %v392 = vrot.slane %v391, 1
      %v393 = vadd.f32 %v391, %v392
      %v395 = vsel %vm262, %v364, 0
      %397 = vmatprep.subr.mxu0 0.0
      %398 = vmatpush1.msra.mxu0 %v342
      %399 = vmatprep.subr.mxu0 0.0
      %400 = vmatpush1.msra.mxu0 %v343
      %401 = vmatprep.subr.mxu0 0.0
      %402 = vmatpush1.msra.mxu0 0.0
      %403 = vmatprep.subr.mxu0 0.0
      %404 = vmatpush1.msra.mxu0 0.0
      %405 = vmatprep.subr.mxu0 0.0
      %406 = vmatpush1.msra.mxu0 0.0
      %407 = vmatprep.subr.mxu0 0.0
      %408 = vmatpush1.msra.mxu0 0.0
      %409 = vmatprep.subr.mxu0 0.0
      %410 = vmatpush1.msra.mxu0 0.0
      %411 = vmatprep.subr.mxu0 0.0
      %412 = vmatpush1.msra.mxu0 0.0
      %413 = vmatprep.subr.mxu0 0.0
      %414 = vmatpush1.msra.mxu0 0.0
      %415 = vmatprep.subr.mxu0 0.0
      %416 = vmatpush1.msra.mxu0 0.0
      %417 = vmatprep.subr.mxu0 0.0
      %418 = vmatpush1.msra.mxu0 0.0
      %419 = vmatprep.subr.mxu0 0.0
      %420 = vmatpush1.msra.mxu0 0.0
      %421 = vmatprep.subr.mxu0 0.0
      %422 = vmatpush1.msra.mxu0 0.0
      %423 = vmatprep.subr.mxu0 0.0
      %424 = vmatpush1.msra.mxu0 0.0
      %425 = vmatprep.subr.mxu0 0.0
      %426 = vmatpush1.msra.mxu0 0.0
      %427 = vmatprep.subr.mxu0 0.0
      %428 = vmatpush1.msra.mxu0 0.0
      %429 = vmatprep.subr.mxu0 0.0
      %430 = vmatpush1.msra.mxu0 0.0
      %431 = vmatprep.subr.mxu0 0.0
      %432 = vmatpush1.msra.mxu0 0.0
      %433 = vmatprep.subr.mxu0 0.0
      %434 = vmatpush1.msra.mxu0 0.0
      %435 = vmatprep.subr.mxu0 0.0
      %436 = vmatpush1.msra.mxu0 0.0
      %437 = vmatprep.subr.mxu0 0.0
      %438 = vmatpush1.msra.mxu0 0.0
      %439 = vmatprep.subr.mxu0 0.0
      %440 = vmatpush1.msra.mxu0 0.0
      %441 = vmatprep.subr.mxu0 0.0
      %442 = vmatpush1.msra.mxu0 0.0
      %443 = vmatprep.subr.mxu0 0.0
      %444 = vmatpush1.msra.mxu0 0.0
      %445 = vmatprep.subr.mxu0 0.0
      %446 = vmatpush1.msra.mxu0 0.0
      %447 = vmatprep.subr.mxu0 0.0
      %448 = vmatpush1.msra.mxu0 0.0
      %449 = vmatprep.subr.mxu0 0.0
      %450 = vmatpush1.msra.mxu0 0.0
      %451 = vmatprep.subr.mxu0 0.0
      %452 = vmatpush1.msra.mxu0 0.0
      %453 = vmatprep.subr.mxu0 0.0
      %454 = vmatpush1.msra.mxu0 0.0
      %455 = vmatprep.subr.mxu0 0.0
      %456 = vmatpush1.msra.mxu0 0.0
      %457 = vmatprep.subr.mxu0 0.0
      %458 = vmatpush1.msra.mxu0 0.0
      %459 = vmatprep.subr.mxu0 0.0
      %460 = vmatpush1.msra.mxu0 0.0
      %461 = vmatprep.mubr.f32.mxu0 0.0
      %462 = vmatmul.mubr.f32.gmra.mrb[0].mxu0 %v395
      %v463 = vpop.f32.mrb[0].mxu0
      %v464 = vadd.f32 0.0, %v463
      %v465 = vpop.f32.mrb[0].mxu0
      %466 = vdwg.mxu0
      %v467 = vrcp.pop 64.0
      %v468 = vmul.f32 %v464, %v467
      %v470 = vsel %vm262, %v393, 0
      %472 = vmatprep.subr.mxu0 0.0
      %473 = vmatpush1.msra.mxu0 %v342
      %474 = vmatprep.subr.mxu0 0.0
      %475 = vmatpush1.msra.mxu0 %v343
      %476 = vmatprep.subr.mxu0 0.0
      %477 = vmatpush1.msra.mxu0 0.0
      %478 = vmatprep.subr.mxu0 0.0
      %479 = vmatpush1.msra.mxu0 0.0
      %480 = vmatprep.subr.mxu0 0.0
      %481 = vmatpush1.msra.mxu0 0.0
      %482 = vmatprep.subr.mxu0 0.0
      %483 = vmatpush1.msra.mxu0 0.0
      %484 = vmatprep.subr.mxu0 0.0
      %485 = vmatpush1.msra.mxu0 0.0
      %486 = vmatprep.subr.mxu0 0.0
      %487 = vmatpush1.msra.mxu0 0.0
      %488 = vmatprep.subr.mxu0 0.0
      %489 = vmatpush1.msra.mxu0 0.0
      %490 = vmatprep.subr.mxu0 0.0
      %491 = vmatpush1.msra.mxu0 0.0
      %492 = vmatprep.subr.mxu0 0.0
      %493 = vmatpush1.msra.mxu0 0.0
      %494 = vmatprep.subr.mxu0 0.0
      %495 = vmatpush1.msra.mxu0 0.0
      %496 = vmatprep.subr.mxu0 0.0
      %497 = vmatpush1.msra.mxu0 0.0
      %498 = vmatprep.subr.mxu0 0.0
      %499 = vmatpush1.msra.mxu0 0.0
      %500 = vmatprep.subr.mxu0 0.0
      %501 = vmatpush1.msra.mxu0 0.0
      %502 = vmatprep.subr.mxu0 0.0
      %503 = vmatpush1.msra.mxu0 0.0
      %504 = vmatprep.subr.mxu0 0.0
      %505 = vmatpush1.msra.mxu0 0.0
      %506 = vmatprep.subr.mxu0 0.0
      %507 = vmatpush1.msra.mxu0 0.0
      %508 = vmatprep.subr.mxu0 0.0
      %509 = vmatpush1.msra.mxu0 0.0
      %510 = vmatprep.subr.mxu0 0.0
      %511 = vmatpush1.msra.mxu0 0.0
      %512 = vmatprep.subr.mxu0 0.0
      %513 = vmatpush1.msra.mxu0 0.0
      %514 = vmatprep.subr.mxu0 0.0
      %515 = vmatpush1.msra.mxu0 0.0
      %516 = vmatprep.subr.mxu0 0.0
      %517 = vmatpush1.msra.mxu0 0.0
      %518 = vmatprep.subr.mxu0 0.0
      %519 = vmatpush1.msra.mxu0 0.0
      %520 = vmatprep.subr.mxu0 0.0
      %521 = vmatpush1.msra.mxu0 0.0
      %522 = vmatprep.subr.mxu0 0.0
      %523 = vmatpush1.msra.mxu0 0.0
      %524 = vmatprep.subr.mxu0 0.0
      %525 = vmatpush1.msra.mxu0 0.0
      %526 = vmatprep.subr.mxu0 0.0
      %527 = vmatpush1.msra.mxu0 0.0
      %528 = vmatprep.subr.mxu0 0.0
      %529 = vmatpush1.msra.mxu0 0.0
      %530 = vmatprep.subr.mxu0 0.0
      %531 = vmatpush1.msra.mxu0 0.0
      %532 = vmatprep.subr.mxu0 0.0
      %533 = vmatpush1.msra.mxu0 0.0
      %534 = vmatprep.subr.mxu0 0.0
      %535 = vmatpush1.msra.mxu0 0.0
      %536 = vmatprep.mubr.f32.mxu0 0.0
      %537 = vmatmul.mubr.f32.gmra.mrb[0].mxu0 %v470
      %v538 = vpop.f32.mrb[0].mxu0
      %v539 = vadd.f32 0.0, %v538
      %v540 = vpop.f32.mrb[0].mxu0
      %541 = vdwg.mxu0
      %v542 = vmul.f32 %v539, %v467
      %v543 = vmul.f32 %v468, %v468
      %v544 = vsub.f32 %v542, %v543
      %v545 = vadd.f32 %v544, 1e-05
      %v546 = vrsqrt.pop %v545
      %v547 = vlaneseq
      %v548 = vshrl.u32 %v547, 7
      %v549 = vsub.s32 0, %v548
      %v550 = vrot.slane %v468, %v549
      %v551 = vsub.f32 %v310, %v550
      %v552 = vsub.f32 %v313, %v550
      %v553 = vsub.f32 %v318, %v550
      %v554 = vsub.f32 %v321, %v550
      %v555 = vsub.f32 %v326, %v550
      %v556 = vsub.f32 %v329, %v550
      %v557 = vsub.f32 %v334, %v550
      %v558 = vsub.f32 %v337, %v550
      %v559 = vlaneseq
      %v560 = vshrl.u32 %v559, 7
      %v561 = vsub.s32 0, %v560
      %v562 = vrot.slane %v546, %v561
      %v563 = vmul.f32 %v551, %v562
      %v564 = vmul.f32 %v552, %v562
      %v565 = vmul.f32 %v553, %v562
      %v566 = vmul.f32 %v554, %v562
      %v567 = vmul.f32 %v555, %v562
      %v568 = vmul.f32 %v556, %v562
      %v569 = vmul.f32 %v557, %v562
      %v570 = vmul.f32 %v558, %v562
      %v572 = vlaneseq
      %v573 = vshrl.u32 %v572, 7
      %v574 = vsub.s32 0, %v573
      %v575 = vrot.slane %v340, %v574
      %v577 = vmul.f32 %v563, %v575
      %v578 = vmul.f32 %v564, %v575
      %v579 = vmul.f32 %v565, %v575
      %v580 = vmul.f32 %v566, %v575
      %v581 = vmul.f32 %v567, %v575
      %v582 = vmul.f32 %v568, %v575
      %v583 = vmul.f32 %v569, %v575
      %v584 = vmul.f32 %v570, %v575
      %v586 = vlaneseq
      %v587 = vshrl.u32 %v586, 7
      %v588 = vsub.s32 0, %v587
      %v589 = vrot.slane %v341, %v588
      %v591 = vadd.f32 %v577, %v589
      %v592 = vadd.f32 %v578, %v589
      %v593 = vadd.f32 %v579, %v589
      %v594 = vadd.f32 %v580, %v589
      %v595 = vadd.f32 %v581, %v589
      %v596 = vadd.f32 %v582, %v589
      %v597 = vadd.f32 %v583, %v589
      %v598 = vadd.f32 %v584, %v589
      %v599 = vmax.f32 %v591, 0.0
      %v600 = vmax.f32 %v592, 0.0
      %v601 = vmax.f32 %v593, 0.0
      %v602 = vmax.f32 %v594, 0.0
      %v603 = vmax.f32 %v595, 0.0
      %v604 = vmax.f32 %v596, 0.0
      %v605 = vmax.f32 %v597, 0.0
      %v606 = vmax.f32 %v598, 0.0
      %v607 = vpack.c.bf16 %v600, %v599
      %v608 = vpack.c.bf16 %v602, %v601
      %v609 = vpack.c.bf16 %v604, %v603
      %v610 = vpack.c.bf16 %v606, %v605
      %v615 = vunpack.c.l.b16 %v607
      %v616 = vunpack.c.h.b16 %v607
      %v617 = vunpack.c.l.b16 %v608
      %v618 = vunpack.c.h.b16 %v608
      %v619 = vunpack.c.l.b16 %v609
      %v620 = vunpack.c.h.b16 %v609
      %v621 = vunpack.c.l.b16 %v610
      %v622 = vunpack.c.h.b16 %v610
      %v623 = vpack.c.b16 %v615, %v615
      %v624 = vpack.c.b16 %v616, %v616
      %v625 = vpack.c.b16 %v617, %v617
      %v626 = vpack.c.b16 %v618, %v618
      %v627 = vpack.c.b16 %v619, %v619
      %v628 = vpack.c.b16 %v620, %v620
      %v629 = vpack.c.b16 %v621, %v621
      %v630 = vpack.c.b16 %v622, %v622
      %vm639 = vcmask 125952
      %640 = vst.msk [vmem:[%s224] sm:$0xf] %vm639, %v623
      %641 = vst.msk [vmem:[%s224 + $0x4] sm:$0xf] %vm639, %v624
      %642 = vst.msk [vmem:[%s224 + $0x8] sm:$0xf] %vm639, %v625
      %643 = vst.msk [vmem:[%s224 + $0xc] sm:$0xf] %vm639, %v626
      %644 = vst.msk [vmem:[%s224 + $0x10] sm:$0xf] %vm639, %v627
      %645 = vst.msk [vmem:[%s224 + $0x14] sm:$0xf] %vm639, %v628
      %646 = vst.msk [vmem:[%s224 + $0x18] sm:$0xf] %vm639, %v629
      %647 = vst.msk [vmem:[%s224 + $0x1c] sm:$0xf] %vm639, %v630
      %p648 = scmp.lt.s32.totalorder %s16, 1
      %s649 = scalar_select %p648, %s16, 1
      %s650 = smul.addr %s649, 8
      %s651 = smul.addr %s650, 4
      %s652 = scalar_lea.vmem %s5, %s651
      // Predicated region
      $region41: #{bottleneck_forward.3} parent=39 // pred_check
        %p653 = pneg %p144
      $region42: #{bottleneck_forward.3} parent=39 // pred_check_branch
        %655 = sbr.rel (%p653) target = $region44
      $region43: #{bottleneck_forward.3} parent=39 // pred_region
        _
      $region44: #{bottleneck_forward.3} parent=39 // pred_fallthru
        _
    $region40: #{bottleneck_forward.3} parent=5 // pred_fallthru
      _
    %p656 = scmp.le.s32.totalorder 2, %s11
    // Predicated region
    $region45: #{bottleneck_forward.3} parent=5 // pred_check
      %p657 = pneg %p656
    $region46: #{bottleneck_forward.3} parent=5 // pred_check_branch
      %659 = sbr.rel (%p657) target = $region48
    $region47: #{bottleneck_forward.3} parent=5 // pred_region
      %s660 = ssub.s32 %s11, 2
      // Predicated region
      $region49: #{bottleneck_forward.3} parent=47 // pred_check
        %p661 = pneg %p150
      $region50: #{bottleneck_forward.3} parent=47 // pred_check_branch
        %663 = sbr.rel (%p661) target = $region52
      $region51: #{bottleneck_forward.3} parent=47 // pred_region
        %p664 = scmp.lt.s32.totalorder %s17, 1
        %s665 = scalar_select %p664, %s17, 1
        %s666 = smul.addr %s665, 8
        %s667 = smul.addr %s666, 4
        %s668 = scalar_lea.vmem %s5, %s667
      $region52: #{bottleneck_forward.3} parent=47 // pred_fallthru
        _
    $region48: #{bottleneck_forward.3} parent=5 // pred_fallthru
      _
  $region6: #{bottleneck_forward.3} parent=0 // loop_footer
    %s15 = sadd.s32 1, %s11
  $region7: #{bottleneck_forward.3} parent=0 // loop_footer_branch
    %10 = sbr.rel target = $region3
  $region8: #{bottleneck_forward.3} parent=0 // loop_exit
    _

// kernel: bottleneck_forward.4
$region0: #{bottleneck_forward.4}
  #allocation0 [shape = 'u32[]', space=smem, size = 0x4, offset = 0x4, fixed_abs, tag = 'smem constant byte address 0x4 - core index']
  #allocation1 [shape = 'u32[144,128]{1,0:T(1,128)}', space=vmem, size = 0x12000, scoped, tag = 'internal scratch']
  %s0 = inlined_call_operand.vmem [shape: bf16[2,64,144], index: 0, kind: input, shape index: {}]
  %s1 = inlined_call_operand.vmem [shape: bf16[144,16], index: 1, kind: input, shape index: {}]
  %s2 = inlined_call_operand.vmem [shape: f32[1,16], index: 2, kind: input, shape index: {}]
  %s3 = inlined_call_operand.vmem [shape: f32[1,16], index: 3, kind: input, shape index: {}]
  %s4 = inlined_call_operand.vmem [shape: f32[16,16], index: 4, kind: input, shape index: {}]
  %s5 = inlined_call_operand.vmem [shape: bf16[2,64,16], index: 5, kind: output, shape index: {}]
  %s6 = sld [smem:[#allocation0]]
  $region53: #{bottleneck_forward.4} parent=0
    _
  %s8 = ssub.s32 1, %s6
  %s9 = scalar_select 0, %s8, %s6
  loop: start=0, step=1, limit=4
  $region2: #{bottleneck_forward.4} parent=0 // loop_pre_header
    _
  $region3: #{bottleneck_forward.4} parent=0 // loop_header
    %s11 = sphi 0, %s15
    %p12 = scmp.ge.s32.totalorder %s11, 4
    %s21 = sphi 0, %s23
    %s24 = sphi 0, %s21
    %s25 = sphi 0, %s24
    %s41 = sphi 0, %s25
    %s45 = sphi 0, %s45
    %s47 = sphi 0, %s45
    %s48 = sphi 0, %s47
    %s62 = sphi 0, %s48
    %s66 = sphi 0, %s66
    %s68 = sphi 0, %s66
    %s69 = sphi 0, %s68
    %s83 = sphi 0, %s69
    %s87 = sphi 0, %s87
    %s89 = sphi 0, %s87
    %s90 = sphi 0, %s89
    %s104 = sphi 0, %s90
    %s108 = sphi 0, %s108
    %s110 = sphi 0, %s108
    %s111 = sphi 0, %s110
    %s125 = sphi 0, %s111
    %s131 = sphi 0, %s133
    %s134 = sphi 0, %s131
    %s135 = sphi 0, %s134
    %s151 = sphi 0, %s135
  $region4: #{bottleneck_forward.4} parent=0 // loop_header_branch
    %14 = sbr.rel (%p12) target = $region8
  $region5: #{bottleneck_forward.4} parent=0 // loop_body
    %s16 = ssub.s32 %s11, 1
    %s17 = ssub.s32 %s11, 2
    %s18 = sadd.s32 %s11, 1
    %s19 = ssub.s32 %s11, %s18
    %p20 = scmp.eq.s32.totalorder %s19, 0
    %s22 = sadd.s32 %s21, 1
    %s23 = scalar_select %p20, %s21, %s22
    %p26 = pneg %p20
    %p27 = scmp.eq.s32.totalorder %s11, 1
    %p28 = por %p26, %p27
    %p29 = scmp.ne.s32.totalorder %s21, %s24
    %p30 = scmp.eq.s32.totalorder %s11, 0
    %p31 = por %p29, %p30
    %p32 = scmp.ne.s32.totalorder %s21, %s24
    %p33 = scmp.eq.s32.totalorder %s16, 1
    %p34 = por %p32, %p33
    %p35 = scmp.ne.s32.totalorder %s24, %s25
    %p36 = scmp.eq.s32.totalorder %s16, 0
    %p37 = por %p35, %p36
    %p38 = scmp.ne.s32.totalorder %s24, %s25
    %p39 = scmp.eq.s32.totalorder %s17, 1
    %p40 = por %p38, %p39
    %p42 = scmp.ne.s32.totalorder %s25, %s41
    %p43 = scmp.eq.s32.totalorder %s17, 0
    %p44 = por %p42, %p43
    %s46 = sadd.s32 %s45, 1
    %p49 = scmp.eq.s32.totalorder %s11, 1
    %p50 = scmp.ne.s32.totalorder %s45, %s47
    %p51 = scmp.eq.s32.totalorder %s11, 0
    %p52 = por %p50, %p51
    %p53 = scmp.ne.s32.totalorder %s45, %s47
    %p54 = scmp.eq.s32.totalorder %s16, 1
    %p55 = por %p53, %p54
    %p56 = scmp.ne.s32.totalorder %s47, %s48
    %p57 = scmp.eq.s32.totalorder %s16, 0
    %p58 = por %p56, %p57
    %p59 = scmp.ne.s32.totalorder %s47, %s48
    %p60 = scmp.eq.s32.totalorder %s17, 1
    %p61 = por %p59, %p60
    %p63 = scmp.ne.s32.totalorder %s48, %s62
    %p64 = scmp.eq.s32.totalorder %s17, 0
    %p65 = por %p63, %p64
    %s67 = sadd.s32 %s66, 1
    %p70 = scmp.eq.s32.totalorder %s11, 1
    %p71 = scmp.ne.s32.totalorder %s66, %s68
    %p72 = scmp.eq.s32.totalorder %s11, 0
    %p73 = por %p71, %p72
    %p74 = scmp.ne.s32.totalorder %s66, %s68
    %p75 = scmp.eq.s32.totalorder %s16, 1
    %p76 = por %p74, %p75
    %p77 = scmp.ne.s32.totalorder %s68, %s69
    %p78 = scmp.eq.s32.totalorder %s16, 0
    %p79 = por %p77, %p78
    %p80 = scmp.ne.s32.totalorder %s68, %s69
    %p81 = scmp.eq.s32.totalorder %s17, 1
    %p82 = por %p80, %p81
    %p84 = scmp.ne.s32.totalorder %s69, %s83
    %p85 = scmp.eq.s32.totalorder %s17, 0
    %p86 = por %p84, %p85
    %s88 = sadd.s32 %s87, 1
    %p91 = scmp.eq.s32.totalorder %s11, 1
    %p92 = scmp.ne.s32.totalorder %s87, %s89
    %p93 = scmp.eq.s32.totalorder %s11, 0
    %p94 = por %p92, %p93
    %p95 = scmp.ne.s32.totalorder %s87, %s89
    %p96 = scmp.eq.s32.totalorder %s16, 1
    %p97 = por %p95, %p96
    %p98 = scmp.ne.s32.totalorder %s89, %s90
    %p99 = scmp.eq.s32.totalorder %s16, 0
    %p100 = por %p98, %p99
    %p101 = scmp.ne.s32.totalorder %s89, %s90
    %p102 = scmp.eq.s32.totalorder %s17, 1
    %p103 = por %p101, %p102
    %p105 = scmp.ne.s32.totalorder %s90, %s104
    %p106 = scmp.eq.s32.totalorder %s17, 0
    %p107 = por %p105, %p106
    %s109 = sadd.s32 %s108, 1
    %p112 = scmp.eq.s32.totalorder %s11, 1
    %p113 = scmp.ne.s32.totalorder %s108, %s110
    %p114 = scmp.eq.s32.totalorder %s11, 0
    %p115 = por %p113, %p114
    %p116 = scmp.ne.s32.totalorder %s108, %s110
    %p117 = scmp.eq.s32.totalorder %s16, 1
    %p118 = por %p116, %p117
    %p119 = scmp.ne.s32.totalorder %s110, %s111
    %p120 = scmp.eq.s32.totalorder %s16, 0
    %p121 = por %p119, %p120
    %p122 = scmp.ne.s32.totalorder %s110, %s111
    %p123 = scmp.eq.s32.totalorder %s17, 1
    %p124 = por %p122, %p123
    %p126 = scmp.ne.s32.totalorder %s111, %s125
    %p127 = scmp.eq.s32.totalorder %s17, 0
    %p128 = por %p126, %p127
    %s129 = ssub.s32 %s11, %s18
    %p130 = scmp.eq.s32.totalorder %s129, 0
    %s132 = sadd.s32 %s131, 1
    %s133 = scalar_select %p130, %s131, %s132
    %p136 = pneg %p130
    %p137 = scmp.eq.s32.totalorder %s11, 1
    %p138 = por %p136, %p137
    %p139 = scmp.ne.s32.totalorder %s131, %s134
    %p140 = scmp.eq.s32.totalorder %s11, 0
    %p141 = por %p139, %p140
    %p142 = scmp.ne.s32.totalorder %s131, %s134
    %p143 = scmp.eq.s32.totalorder %s16, 1
    %p144 = por %p142, %p143
    %p145 = scmp.ne.s32.totalorder %s134, %s135
    %p146 = scmp.eq.s32.totalorder %s16, 0
    %p147 = por %p145, %p146
    %p148 = scmp.ne.s32.totalorder %s134, %s135
    %p149 = scmp.eq.s32.totalorder %s17, 1
    %p150 = por %p148, %p149
    %p152 = scmp.ne.s32.totalorder %s135, %s151
    %p153 = scmp.eq.s32.totalorder %s17, 0
    %p154 = por %p152, %p153
    %p155 = scmp.le.s32.totalorder 1, %s11
    %p156 = scmp.lt.s32.totalorder %s11, 3
    %p157 = pnand %p155, %p156
    %p158 = pneg %p157
    // Predicated region
    $region9: #{bottleneck_forward.4} parent=5 // pred_check
      _
    $region10: #{bottleneck_forward.4} parent=5 // pred_check_branch
      %160 = sbr.rel (%p157) target = $region12
    $region11: #{bottleneck_forward.4} parent=5 // pred_region
      %s161 = ssub.s32 %s11, 1
      // Predicated region
      $region13: #{bottleneck_forward.4} parent=11 // pred_check
        %p162 = pneg %p58
      $region14: #{bottleneck_forward.4} parent=11 // pred_check_branch
        %164 = sbr.rel (%p162) target = $region16
      $region15: #{bottleneck_forward.4} parent=11 // pred_region
        _
      $region16: #{bottleneck_forward.4} parent=11 // pred_fallthru
        _
      // Predicated region
      $region17: #{bottleneck_forward.4} parent=11 // pred_check
        %p165 = pneg %p79
      $region18: #{bottleneck_forward.4} parent=11 // pred_check_branch
        %167 = sbr.rel (%p165) target = $region20
      $region19: #{bottleneck_forward.4} parent=11 // pred_region
        _
      $region20: #{bottleneck_forward.4} parent=11 // pred_fallthru
        _
      // Predicated region
      $region21: #{bottleneck_forward.4} parent=11 // pred_check
        %p168 = pneg %p100
      $region22: #{bottleneck_forward.4} parent=11 // pred_check_branch
        %170 = sbr.rel (%p168) target = $region24
      $region23: #{bottleneck_forward.4} parent=11 // pred_region
        _
      $region24: #{bottleneck_forward.4} parent=11 // pred_fallthru
        _
      // Predicated region
      $region25: #{bottleneck_forward.4} parent=11 // pred_check
        %p171 = pneg %p121
      $region26: #{bottleneck_forward.4} parent=11 // pred_check_branch
        %173 = sbr.rel (%p171) target = $region28
      $region27: #{bottleneck_forward.4} parent=11 // pred_region
        _
      $region28: #{bottleneck_forward.4} parent=11 // pred_fallthru
        _
    $region12: #{bottleneck_forward.4} parent=5 // pred_fallthru
      _
    %p174 = scmp.lt.s32.totalorder %s11, 2
    // Predicated region
    $region29: #{bottleneck_forward.4} parent=5 // pred_check
      %p175 = pneg %p174
    $region30: #{bottleneck_forward.4} parent=5 // pred_check_branch
      %177 = sbr.rel (%p175) target = $region32
    $region31: #{bottleneck_forward.4} parent=5 // pred_region
      // Predicated region
      $region33: #{bottleneck_forward.4} parent=31 // pred_check
        %p178 = pneg %p31
      $region34: #{bottleneck_forward.4} parent=31 // pred_check_branch
        %180 = sbr.rel (%p178) target = $region36
      $region35: #{bottleneck_forward.4} parent=31 // pred_region
        %p181 = scmp.lt.s32.totalorder %s11, 1
        %s182 = scalar_select %p181, %s11, 1
        %s183 = smul.addr %s182, 16
        %s184 = smul.addr %s183, 4
        %s185 = scalar_lea.vmem %s0, %s184
      $region36: #{bottleneck_forward.4} parent=31 // pred_fallthru
        _
    $region32: #{bottleneck_forward.4} parent=5 // pred_fallthru
      _
    %p186 = scmp.le.s32.totalorder 1, %s11
    %p187 = scmp.lt.s32.totalorder %s11, 3
    %p188 = pnand %p186, %p187
    %p189 = pneg %p188
    // Predicated region
    $region37: #{bottleneck_forward.4} parent=5 // pred_check
      _
    $region38: #{bottleneck_forward.4} parent=5 // pred_check_branch
      %191 = sbr.rel (%p188) target = $region40
    $region39: #{bottleneck_forward.4} parent=5 // pred_region
      %s192 = ssub.s32 %s11, 1
      %p193 = scmp.lt.s32.totalorder %s16, 1
      %s194 = scalar_select %p193, %s16, 1
      %s195 = smul.addr %s194, 16
      %s196 = smul.addr %s195, 4
      %s197 = scalar_lea.vmem %s0, %s196
      %p198 = pneg %p37
      %p199 = pneg %p34
      %p200 = pneg %p58
      %p201 = pneg %p55
      %p202 = pneg %p79
      %p203 = pneg %p76
      %p204 = pneg %p100
      %p205 = pneg %p97
      %p206 = pneg %p121
      %p207 = pneg %p118
      %p208 = pneg %p147
      %p209 = pneg %p144
      %p210 = scmp.lt.s32.totalorder %s16, 1
      %s211 = scalar_select %p210, %s16, 1
      %s212 = smul.addr %s211, 8
      %s213 = smul.addr %s212, 4
      %s214 = scalar_lea.vmem %s5, %s213
      %p215 = scmp.lt.s32.totalorder %s16, 1
      %s216 = scalar_select %p215, %s16, 1
      %s217 = smul.addr %s216, 16
      %s218 = smul.addr %s217, 4
      %s219 = scalar_lea.vmem %s0, %s218
      %p220 = scmp.lt.s32.totalorder %s16, 1
      %s221 = scalar_select %p220, %s16, 1
      %s222 = smul.addr %s221, 8
      %s223 = smul.addr %s222, 4
      %s224 = scalar_lea.vmem %s5, %s223
      %v226 = vld [vmem:[%s219] sm:$0xff]
      %v227 = vld [vmem:[%s219 + $0x8] sm:$0xff]
      %v228 = vld [vmem:[%s219 + $0x10] sm:$0xff]
      %v229 = vld [vmem:[%s219 + $0x18] sm:$0xff]
      %v230 = vld [vmem:[%s219 + $0x20] sm:$0xff]
      %v231 = vld [vmem:[%s219 + $0x28] sm:$0xff]
      %v232 = vld [vmem:[%s219 + $0x30] sm:$0xff]
      %v233 = vld [vmem:[%s219 + $0x38] sm:$0xff]
      %v234 = vld [vmem:[%s1] sm:$0xf]
      %v235 = vld [vmem:[%s1 + $0x4] sm:$0xf]
      %v236 = vld [vmem:[%s1 + $0x8] sm:$0xf]
      %v237 = vld [vmem:[%s1 + $0xc] sm:$0xf]
      %v238 = vld [vmem:[%s1 + $0x10] sm:$0xf]
      %v239 = vld [vmem:[%s1 + $0x14] sm:$0xf]
      %v240 = vld [vmem:[%s1 + $0x18] sm:$0xf]
      %v241 = vld [vmem:[%s1 + $0x1c] sm:$0xf]
      %v242 = vld [vmem:[%s1 + $0x20] sm:$0xf]
      %v243 = vld [vmem:[%s1 + $0x24] sm:$0xf]
      %v244 = vld [vmem:[%s1 + $0x28] sm:$0xf]
      %v245 = vld [vmem:[%s1 + $0x2c] sm:$0xf]
      %v246 = vld [vmem:[%s1 + $0x30] sm:$0xf]
      %v247 = vld [vmem:[%s1 + $0x34] sm:$0xf]
      %v248 = vld [vmem:[%s1 + $0x38] sm:$0xf]
      %v249 = vld [vmem:[%s1 + $0x3c] sm:$0xf]
      %v250 = vld [vmem:[%s1 + $0x40] sm:$0xf]
      %v251 = vld [vmem:[%s1 + $0x44] sm:$0xf]
      %v260 = vunpack.c.l.b16 %v226
      %v261 = vunpack.c.h.b16 %v226
      %v262 = vunpack.c.l.b16 %v227
      %v263 = vunpack.c.h.b16 %v227
      %v264 = vunpack.c.l.b16 %v228
      %v265 = vunpack.c.h.b16 %v228
      %v266 = vunpack.c.l.b16 %v229
      %v267 = vunpack.c.h.b16 %v229
      %v268 = vunpack.c.l.b16 %v230
      %v269 = vunpack.c.h.b16 %v230
      %v270 = vunpack.c.l.b16 %v231
      %v271 = vunpack.c.h.b16 %v231
      %v272 = vunpack.c.l.b16 %v232
      %v273 = vunpack.c.h.b16 %v232
      %v274 = vunpack.c.l.b16 %v233
      %v275 = vunpack.c.h.b16 %v233
      %v276 = vpack.c.b16 %v262, %v260
      %v277 = vpack.c.b16 %v263, %v261
      %v278 = vpack.c.b16 %v266, %v264
      %v279 = vpack.c.b16 %v267, %v265
      %v280 = vpack.c.b16 %v270, %v268
      %v281 = vpack.c.b16 %v271, %v269
      %v282 = vpack.c.b16 %v274, %v272
      %v283 = vpack.c.b16 %v275, %v273
      %v306 = vunpack.c.l.b16 %v234
      %v307 = vunpack.c.l.b16 %v235
      %v308 = vunpack.c.l.b16 %v236
      %v309 = vunpack.c.l.b16 %v237
      %v310 = vunpack.c.l.b16 %v238
      %v311 = vunpack.c.l.b16 %v239
      %v312 = vunpack.c.l.b16 %v240
      %v313 = vunpack.c.l.b16 %v241
      %v314 = vunpack.c.l.b16 %v242
      %v315 = vunpack.c.l.b16 %v243
      %v316 = vunpack.c.l.b16 %v244
      %v317 = vunpack.c.l.b16 %v245
      %v318 = vunpack.c.l.b16 %v246
      %v319 = vunpack.c.l.b16 %v247
      %v320 = vunpack.c.l.b16 %v248
      %v321 = vunpack.c.l.b16 %v249
      %v322 = vunpack.c.l.b16 %v250
      %v323 = vunpack.c.l.b16 %v251
      %v324 = vpack.c.b16 %v307, %v306
      %v325 = vpack.c.b16 %v309, %v308
      %v326 = vpack.c.b16 %v311, %v310
      %v327 = vpack.c.b16 %v313, %v312
      %v328 = vpack.c.b16 %v315, %v314
      %v329 = vpack.c.b16 %v317, %v316
      %v330 = vpack.c.b16 %v319, %v318
      %v331 = vpack.c.b16 %v321, %v320
      %v332 = vpack.c.b16 %v323, %v322
      %vm342 = vcmask 130048
      %v344 = vsel %vm342, %v277, 0
      %v347 = vsel %vm342, %v279, 0
      %v350 = vsel %vm342, %v281, 0
      %v353 = vsel %vm342, %v283, 0
      %355 = vmatprep.subr.bf16.mxu0 0
      %356 = vmatpush1.bf16.msra.mxu0 %v324
      %357 = vmatprep.subr.bf16.mxu0 0
      %358 = vmatpush1.bf16.msra.mxu0 %v325
      %359 = vmatprep.subr.bf16.mxu0 0
      %360 = vmatpush1.bf16.msra.mxu0 %v326
      %361 = vmatprep.subr.bf16.mxu0 0
      %362 = vmatpush1.bf16.msra.mxu0 %v327
      %363 = vmatprep.subr.bf16.mxu0 0
      %364 = vmatpush1.bf16.msra.mxu0 %v328
      %365 = vmatprep.subr.bf16.mxu0 0
      %366 = vmatpush1.bf16.msra.mxu0 %v329
      %367 = vmatprep.subr.bf16.mxu0 0
      %368 = vmatpush1.bf16.msra.mxu0 %v330
      %369 = vmatprep.subr.bf16.mxu0 0
      %370 = vmatpush1.bf16.msra.mxu0 %v331
      %371 = vmatprep.subr.bf16.mxu0 0
      %372 = vmatpush1.bf16.msra.mxu0 %v332
      %373 = vmatprep.subr.bf16.mxu0 0
      %374 = vmatpush1.bf16.msra.mxu0 0
      %375 = vmatprep.subr.bf16.mxu0 0
      %376 = vmatpush1.bf16.msra.mxu0 0
      %377 = vmatprep.subr.bf16.mxu0 0
      %378 = vmatpush1.bf16.msra.mxu0 0
      %379 = vmatprep.subr.bf16.mxu0 0
      %380 = vmatpush1.bf16.msra.mxu0 0
      %381 = vmatprep.subr.bf16.mxu0 0
      %382 = vmatpush1.bf16.msra.mxu0 0
      %383 = vmatprep.subr.bf16.mxu0 0
      %384 = vmatpush1.bf16.msra.mxu0 0
      %385 = vmatprep.subr.bf16.mxu0 0
      %386 = vmatpush1.bf16.msra.mxu0 0
      %387 = vmatprep.mubr.bf16.mxu0 %v344
      %388 = vmatmul.mubr.bf16.gmra.mrb[0].mxu0 %v276
      %v389 = vpop.f32.mrb[0].mxu0
      %v390 = vadd.f32 0.0, %v389
      %v391 = vpop.f32.mrb[0].mxu0
      %v392 = vpop.f32.mrb[0].mxu0
      %v393 = vadd.f32 0.0, %v392
      %v394 = vpop.f32.mrb[0].mxu0
      %395 = vmatprep.mubr.bf16.mxu0 %v347
      %396 = vmatmul.mubr.bf16.gmra.mrb[0].mxu0 %v278
      %v397 = vpop.f32.mrb[0].mxu0
      %v398 = vadd.f32 0.0, %v397
      %v399 = vpop.f32.mrb[0].mxu0
      %v400 = vpop.f32.mrb[0].mxu0
      %v401 = vadd.f32 0.0, %v400
      %v402 = vpop.f32.mrb[0].mxu0
      %403 = vmatprep.mubr.bf16.mxu0 %v350
      %404 = vmatmul.mubr.bf16.gmra.mrb[0].mxu0 %v280
      %v405 = vpop.f32.mrb[0].mxu0
      %v406 = vadd.f32 0.0, %v405
      %v407 = vpop.f32.mrb[0].mxu0
      %v408 = vpop.f32.mrb[0].mxu0
      %v409 = vadd.f32 0.0, %v408
      %v410 = vpop.f32.mrb[0].mxu0
      %411 = vmatprep.mubr.bf16.mxu0 %v353
      %412 = vmatmul.mubr.bf16.gmra.mrb[0].mxu0 %v282
      %v413 = vpop.f32.mrb[0].mxu0
      %v414 = vadd.f32 0.0, %v413
      %v415 = vpop.f32.mrb[0].mxu0
      %v416 = vpop.f32.mrb[0].mxu0
      %v417 = vadd.f32 0.0, %v416
      %v418 = vpop.f32.mrb[0].mxu0
      %419 = vdwg.mxu0
      %v420 = vld [vmem:[%s2] sm:$0x1]
      %v421 = vld [vmem:[%s3] sm:$0x1]
      %v422 = vld [vmem:[%s4] sm:$0xff]
      %v423 = vld [vmem:[%s4 + $0x8] sm:$0xff]
      %v424 = vsel %vm342, %v390, 0.0
      %v425 = vsel %vm342, %v393, 0.0
      %v426 = vadd.f32 %v424, %v425
      %v427 = vsel %vm342, %v398, 0.0
      %v428 = vadd.f32 %v426, %v427
      %v429 = vsel %vm342, %v401, 0.0
      %v430 = vadd.f32 %v428, %v429
      %v431 = vsel %vm342, %v406, 0.0
      %v432 = vadd.f32 %v430, %v431
      %v433 = vsel %vm342, %v409, 0.0
      %v434 = vadd.f32 %v432, %v433
      %v435 = vsel %vm342, %v414, 0.0
      %v436 = vadd.f32 %v434, %v435
      %v437 = vsel %vm342, %v417, 0.0
      %v438 = vadd.f32 %v436, %v437
      %v439 = vrot.slane %v438, 4
      %v440 = vadd.f32 %v438, %v439
      %v441 = vrot.slane %v440, 2
      %v442 = vadd.f32 %v440, %v441
      %v443 = vrot.slane %v442, 1
      %v444 = vadd.f32 %v442, %v443
      %v445 = vmul.f32 %v390, %v390
      %v446 = vmul.f32 %v393, %v393
      %v447 = vmul.f32 %v398, %v398
      %v448 = vmul.f32 %v401, %v401
      %v449 = vmul.f32 %v406, %v406
      %v450 = vmul.f32 %v409, %v409
      %v451 = vmul.f32 %v414, %v414
      %v452 = vmul.f32 %v417, %v417
      %v453 = vsel %vm342, %v445, 0.0
      %v454 = vsel %vm342, %v446, 0.0
      %v455 = vadd.f32 %v453, %v454
      %v456 = vsel %vm342, %v447, 0.0
      %v457 = vadd.f32 %v455, %v456
      %v458 = vsel %vm342, %v448, 0.0
      %v459 = vadd.f32 %v457, %v458
      %v460 = vsel %vm342, %v449, 0.0
      %v461 = vadd.f32 %v459, %v460
      %v462 = vsel %vm342, %v450, 0.0
      %v463 = vadd.f32 %v461, %v462
      %v464 = vsel %vm342, %v451, 0.0
      %v465 = vadd.f32 %v463, %v464
      %v466 = vsel %vm342, %v452, 0.0
      %v467 = vadd.f32 %v465, %v466
      %v468 = vrot.slane %v467, 4
      %v469 = vadd.f32 %v467, %v468
      %v470 = vrot.slane %v469, 2
      %v471 = vadd.f32 %v469, %v470
      %v472 = vrot.slane %v471, 1
      %v473 = vadd.f32 %v471, %v472
      %v475 = vsel %vm342, %v444, 0
      %477 = vmatprep.subr.mxu0 0.0
      %478 = vmatpush1.msra.mxu0 %v422
      %479 = vmatprep.subr.mxu0 0.0
      %480 = vmatpush1.msra.mxu0 %v423
      %481 = vmatprep.subr.mxu0 0.0
      %482 = vmatpush1.msra.mxu0 0.0
      %483 = vmatprep.subr.mxu0 0.0
      %484 = vmatpush1.msra.mxu0 0.0
      %485 = vmatprep.subr.mxu0 0.0
      %486 = vmatpush1.msra.mxu0 0.0
      %487 = vmatprep.subr.mxu0 0.0
      %488 = vmatpush1.msra.mxu0 0.0
      %489 = vmatprep.subr.mxu0 0.0
      %490 = vmatpush1.msra.mxu0 0.0
      %491 = vmatprep.subr.mxu0 0.0
      %492 = vmatpush1.msra.mxu0 0.0
      %493 = vmatprep.subr.mxu0 0.0
      %494 = vmatpush1.msra.mxu0 0.0
      %495 = vmatprep.subr.mxu0 0.0
      %496 = vmatpush1.msra.mxu0 0.0
      %497 = vmatprep.subr.mxu0 0.0
      %498 = vmatpush1.msra.mxu0 0.0
      %499 = vmatprep.subr.mxu0 0.0
      %500 = vmatpush1.msra.mxu0 0.0
      %501 = vmatprep.subr.mxu0 0.0
      %502 = vmatpush1.msra.mxu0 0.0
      %503 = vmatprep.subr.mxu0 0.0
      %504 = vmatpush1.msra.mxu0 0.0
      %505 = vmatprep.subr.mxu0 0.0
      %506 = vmatpush1.msra.mxu0 0.0
      %507 = vmatprep.subr.mxu0 0.0
      %508 = vmatpush1.msra.mxu0 0.0
      %509 = vmatprep.subr.mxu0 0.0
      %510 = vmatpush1.msra.mxu0 0.0
      %511 = vmatprep.subr.mxu0 0.0
      %512 = vmatpush1.msra.mxu0 0.0
      %513 = vmatprep.subr.mxu0 0.0
      %514 = vmatpush1.msra.mxu0 0.0
      %515 = vmatprep.subr.mxu0 0.0
      %516 = vmatpush1.msra.mxu0 0.0
      %517 = vmatprep.subr.mxu0 0.0
      %518 = vmatpush1.msra.mxu0 0.0
      %519 = vmatprep.subr.mxu0 0.0
      %520 = vmatpush1.msra.mxu0 0.0
      %521 = vmatprep.subr.mxu0 0.0
      %522 = vmatpush1.msra.mxu0 0.0
      %523 = vmatprep.subr.mxu0 0.0
      %524 = vmatpush1.msra.mxu0 0.0
      %525 = vmatprep.subr.mxu0 0.0
      %526 = vmatpush1.msra.mxu0 0.0
      %527 = vmatprep.subr.mxu0 0.0
      %528 = vmatpush1.msra.mxu0 0.0
      %529 = vmatprep.subr.mxu0 0.0
      %530 = vmatpush1.msra.mxu0 0.0
      %531 = vmatprep.subr.mxu0 0.0
      %532 = vmatpush1.msra.mxu0 0.0
      %533 = vmatprep.subr.mxu0 0.0
      %534 = vmatpush1.msra.mxu0 0.0
      %535 = vmatprep.subr.mxu0 0.0
      %536 = vmatpush1.msra.mxu0 0.0
      %537 = vmatprep.subr.mxu0 0.0
      %538 = vmatpush1.msra.mxu0 0.0
      %539 = vmatprep.subr.mxu0 0.0
      %540 = vmatpush1.msra.mxu0 0.0
      %541 = vmatprep.mubr.f32.mxu0 0.0
      %542 = vmatmul.mubr.f32.gmra.mrb[0].mxu0 %v475
      %v543 = vpop.f32.mrb[0].mxu0
      %v544 = vadd.f32 0.0, %v543
      %v545 = vpop.f32.mrb[0].mxu0
      %546 = vdwg.mxu0
      %v547 = vrcp.pop 64.0
      %v548 = vmul.f32 %v544, %v547
      %v550 = vsel %vm342, %v473, 0
      %552 = vmatprep.subr.mxu0 0.0
      %553 = vmatpush1.msra.mxu0 %v422
      %554 = vmatprep.subr.mxu0 0.0
      %555 = vmatpush1.msra.mxu0 %v423
      %556 = vmatprep.subr.mxu0 0.0
      %557 = vmatpush1.msra.mxu0 0.0
      %558 = vmatprep.subr.mxu0 0.0
      %559 = vmatpush1.msra.mxu0 0.0
      %560 = vmatprep.subr.mxu0 0.0
      %561 = vmatpush1.msra.mxu0 0.0
      %562 = vmatprep.subr.mxu0 0.0
      %563 = vmatpush1.msra.mxu0 0.0
      %564 = vmatprep.subr.mxu0 0.0
      %565 = vmatpush1.msra.mxu0 0.0
      %566 = vmatprep.subr.mxu0 0.0
      %567 = vmatpush1.msra.mxu0 0.0
      %568 = vmatprep.subr.mxu0 0.0
      %569 = vmatpush1.msra.mxu0 0.0
      %570 = vmatprep.subr.mxu0 0.0
      %571 = vmatpush1.msra.mxu0 0.0
      %572 = vmatprep.subr.mxu0 0.0
      %573 = vmatpush1.msra.mxu0 0.0
      %574 = vmatprep.subr.mxu0 0.0
      %575 = vmatpush1.msra.mxu0 0.0
      %576 = vmatprep.subr.mxu0 0.0
      %577 = vmatpush1.msra.mxu0 0.0
      %578 = vmatprep.subr.mxu0 0.0
      %579 = vmatpush1.msra.mxu0 0.0
      %580 = vmatprep.subr.mxu0 0.0
      %581 = vmatpush1.msra.mxu0 0.0
      %582 = vmatprep.subr.mxu0 0.0
      %583 = vmatpush1.msra.mxu0 0.0
      %584 = vmatprep.subr.mxu0 0.0
      %585 = vmatpush1.msra.mxu0 0.0
      %586 = vmatprep.subr.mxu0 0.0
      %587 = vmatpush1.msra.mxu0 0.0
      %588 = vmatprep.subr.mxu0 0.0
      %589 = vmatpush1.msra.mxu0 0.0
      %590 = vmatprep.subr.mxu0 0.0
      %591 = vmatpush1.msra.mxu0 0.0
      %592 = vmatprep.subr.mxu0 0.0
      %593 = vmatpush1.msra.mxu0 0.0
      %594 = vmatprep.subr.mxu0 0.0
      %595 = vmatpush1.msra.mxu0 0.0
      %596 = vmatprep.subr.mxu0 0.0
      %597 = vmatpush1.msra.mxu0 0.0
      %598 = vmatprep.subr.mxu0 0.0
      %599 = vmatpush1.msra.mxu0 0.0
      %600 = vmatprep.subr.mxu0 0.0
      %601 = vmatpush1.msra.mxu0 0.0
      %602 = vmatprep.subr.mxu0 0.0
      %603 = vmatpush1.msra.mxu0 0.0
      %604 = vmatprep.subr.mxu0 0.0
      %605 = vmatpush1.msra.mxu0 0.0
      %606 = vmatprep.subr.mxu0 0.0
      %607 = vmatpush1.msra.mxu0 0.0
      %608 = vmatprep.subr.mxu0 0.0
      %609 = vmatpush1.msra.mxu0 0.0
      %610 = vmatprep.subr.mxu0 0.0
      %611 = vmatpush1.msra.mxu0 0.0
      %612 = vmatprep.subr.mxu0 0.0
      %613 = vmatpush1.msra.mxu0 0.0
      %614 = vmatprep.subr.mxu0 0.0
      %615 = vmatpush1.msra.mxu0 0.0
      %616 = vmatprep.mubr.f32.mxu0 0.0
      %617 = vmatmul.mubr.f32.gmra.mrb[0].mxu0 %v550
      %v618 = vpop.f32.mrb[0].mxu0
      %v619 = vadd.f32 0.0, %v618
      %v620 = vpop.f32.mrb[0].mxu0
      %621 = vdwg.mxu0
      %v622 = vmul.f32 %v619, %v547
      %v623 = vmul.f32 %v548, %v548
      %v624 = vsub.f32 %v622, %v623
      %v625 = vadd.f32 %v624, 1e-05
      %v626 = vrsqrt.pop %v625
      %v627 = vlaneseq
      %v628 = vshrl.u32 %v627, 7
      %v629 = vsub.s32 0, %v628
      %v630 = vrot.slane %v548, %v629
      %v631 = vsub.f32 %v390, %v630
      %v632 = vsub.f32 %v393, %v630
      %v633 = vsub.f32 %v398, %v630
      %v634 = vsub.f32 %v401, %v630
      %v635 = vsub.f32 %v406, %v630
      %v636 = vsub.f32 %v409, %v630
      %v637 = vsub.f32 %v414, %v630
      %v638 = vsub.f32 %v417, %v630
      %v639 = vlaneseq
      %v640 = vshrl.u32 %v639, 7
      %v641 = vsub.s32 0, %v640
      %v642 = vrot.slane %v626, %v641
      %v643 = vmul.f32 %v631, %v642
      %v644 = vmul.f32 %v632, %v642
      %v645 = vmul.f32 %v633, %v642
      %v646 = vmul.f32 %v634, %v642
      %v647 = vmul.f32 %v635, %v642
      %v648 = vmul.f32 %v636, %v642
      %v649 = vmul.f32 %v637, %v642
      %v650 = vmul.f32 %v638, %v642
      %v652 = vlaneseq
      %v653 = vshrl.u32 %v652, 7
      %v654 = vsub.s32 0, %v653
      %v655 = vrot.slane %v420, %v654
      %v657 = vmul.f32 %v643, %v655
      %v658 = vmul.f32 %v644, %v655
      %v659 = vmul.f32 %v645, %v655
      %v660 = vmul.f32 %v646, %v655
      %v661 = vmul.f32 %v647, %v655
      %v662 = vmul.f32 %v648, %v655
      %v663 = vmul.f32 %v649, %v655
      %v664 = vmul.f32 %v650, %v655
      %v666 = vlaneseq
      %v667 = vshrl.u32 %v666, 7
      %v668 = vsub.s32 0, %v667
      %v669 = vrot.slane %v421, %v668
      %v671 = vadd.f32 %v657, %v669
      %v672 = vadd.f32 %v658, %v669
      %v673 = vadd.f32 %v659, %v669
      %v674 = vadd.f32 %v660, %v669
      %v675 = vadd.f32 %v661, %v669
      %v676 = vadd.f32 %v662, %v669
      %v677 = vadd.f32 %v663, %v669
      %v678 = vadd.f32 %v664, %v669
      %v679 = vmax.f32 %v671, 0.0
      %v680 = vmax.f32 %v672, 0.0
      %v681 = vmax.f32 %v673, 0.0
      %v682 = vmax.f32 %v674, 0.0
      %v683 = vmax.f32 %v675, 0.0
      %v684 = vmax.f32 %v676, 0.0
      %v685 = vmax.f32 %v677, 0.0
      %v686 = vmax.f32 %v678, 0.0
      %v687 = vpack.c.bf16 %v680, %v679
      %v688 = vpack.c.bf16 %v682, %v681
      %v689 = vpack.c.bf16 %v684, %v683
      %v690 = vpack.c.bf16 %v686, %v685
      %v695 = vunpack.c.l.b16 %v687
      %v696 = vunpack.c.h.b16 %v687
      %v697 = vunpack.c.l.b16 %v688
      %v698 = vunpack.c.h.b16 %v688
      %v699 = vunpack.c.l.b16 %v689
      %v700 = vunpack.c.h.b16 %v689
      %v701 = vunpack.c.l.b16 %v690
      %v702 = vunpack.c.h.b16 %v690
      %v703 = vpack.c.b16 %v695, %v695
      %v704 = vpack.c.b16 %v696, %v696
      %v705 = vpack.c.b16 %v697, %v697
      %v706 = vpack.c.b16 %v698, %v698
      %v707 = vpack.c.b16 %v699, %v699
      %v708 = vpack.c.b16 %v700, %v700
      %v709 = vpack.c.b16 %v701, %v701
      %v710 = vpack.c.b16 %v702, %v702
      %vm719 = vcmask 125952
      %720 = vst.msk [vmem:[%s224] sm:$0xf] %vm719, %v703
      %721 = vst.msk [vmem:[%s224 + $0x4] sm:$0xf] %vm719, %v704
      %722 = vst.msk [vmem:[%s224 + $0x8] sm:$0xf] %vm719, %v705
      %723 = vst.msk [vmem:[%s224 + $0xc] sm:$0xf] %vm719, %v706
      %724 = vst.msk [vmem:[%s224 + $0x10] sm:$0xf] %vm719, %v707
      %725 = vst.msk [vmem:[%s224 + $0x14] sm:$0xf] %vm719, %v708
      %726 = vst.msk [vmem:[%s224 + $0x18] sm:$0xf] %vm719, %v709
      %727 = vst.msk [vmem:[%s224 + $0x1c] sm:$0xf] %vm719, %v710
      %p728 = scmp.lt.s32.totalorder %s16, 1
      %s729 = scalar_select %p728, %s16, 1
      %s730 = smul.addr %s729, 8
      %s731 = smul.addr %s730, 4
      %s732 = scalar_lea.vmem %s5, %s731
      // Predicated region
      $region41: #{bottleneck_forward.4} parent=39 // pred_check
        %p733 = pneg %p144
      $region42: #{bottleneck_forward.4} parent=39 // pred_check_branch
        %735 = sbr.rel (%p733) target = $region44
      $region43: #{bottleneck_forward.4} parent=39 // pred_region
        _
      $region44: #{bottleneck_forward.4} parent=39 // pred_fallthru
        _
    $region40: #{bottleneck_forward.4} parent=5 // pred_fallthru
      _
    %p736 = scmp.le.s32.totalorder 2, %s11
    // Predicated region
    $region45: #{bottleneck_forward.4} parent=5 // pred_check
      %p737 = pneg %p736
    $region46: #{bottleneck_forward.4} parent=5 // pred_check_branch
      %739 = sbr.rel (%p737) target = $region48
    $region47: #{bottleneck_forward.4} parent=5 // pred_region
      %s740 = ssub.s32 %s11, 2
      // Predicated region
      $region49: #{bottleneck_forward.4} parent=47 // pred_check
        %p741 = pneg %p150
      $region50: #{bottleneck_forward.4} parent=47 // pred_check_branch
        %743 = sbr.rel (%p741) target = $region52
      $region51: #{bottleneck_forward.4} parent=47 // pred_region
        %p744 = scmp.lt.s32.totalorder %s17, 1
        %s745 = scalar_select %p744, %s17, 1
        %s746 = smul.addr %s745, 8
        %s747 = smul.addr %s746, 4
        %s748 = scalar_lea.vmem %s5, %s747
      $region52: #{bottleneck_forward.4} parent=47 // pred_fallthru
        _
    $region48: #{bottleneck_forward.4} parent=5 // pred_fallthru
      _
  $region6: #{bottleneck_forward.4} parent=0 // loop_footer
    %s15 = sadd.s32 1, %s11
  $region7: #{bottleneck_forward.4} parent=0 // loop_footer_branch
    %10 = sbr.rel target = $region3
  $region8: #{bottleneck_forward.4} parent=0 // loop_exit
    _

// kernel: bottleneck_forward.5
$region0: #{bottleneck_forward.5}
  #allocation0 [shape = 'u32[]', space=smem, size = 0x4, offset = 0x4, fixed_abs, tag = 'smem constant byte address 0x4 - core index']
  #allocation1 [shape = 'u32[144,128]{1,0:T(1,128)}', space=vmem, size = 0x12000, scoped, tag = 'internal scratch']
  %s0 = inlined_call_operand.vmem [shape: bf16[2,64,16], index: 0, kind: input, shape index: {}]
  %s1 = inlined_call_operand.vmem [shape: bf16[2,64,16], index: 1, kind: input, shape index: {}]
  %s2 = inlined_call_operand.vmem [shape: bf16[16,64], index: 2, kind: input, shape index: {}]
  %s3 = inlined_call_operand.vmem [shape: bf16[16,64], index: 3, kind: input, shape index: {}]
  %s4 = inlined_call_operand.vmem [shape: f32[1,64], index: 4, kind: input, shape index: {}]
  %s5 = inlined_call_operand.vmem [shape: f32[1,64], index: 5, kind: input, shape index: {}]
  %s6 = inlined_call_operand.vmem [shape: f32[1,64], index: 6, kind: input, shape index: {}]
  %s7 = inlined_call_operand.vmem [shape: f32[1,64], index: 7, kind: input, shape index: {}]
  %s8 = inlined_call_operand.vmem [shape: f32[64,64], index: 8, kind: input, shape index: {}]
  %s9 = inlined_call_operand.hbm [shape: f32[2,64,64], index: 9, kind: output, shape index: {}]
  %s10 = sld [smem:[#allocation0]]
  $region69: #{bottleneck_forward.5} parent=0
    _
  %s12 = ssub.s32 1, %s10
  %s13 = scalar_select 0, %s12, %s10
  $region1: #{bottleneck_forward.5} parent=0
    #allocation2 [shape = 'u8[65536]{0}', space=vmem, size = 0x10000, scoped, tag = 'output window, operand 0']
    #allocation3 [shape = 's32[2]{0}', space=sflag, size = 0x8, scoped, tag = 'scoped memory for bottleneck_forward.5']
    %14 = vsyncpa [#allocation3], 0
    %s15 = scalar_lea.sflag [#allocation3], 1
    %16 = vsyncpa %s15, 0
    loop: start=0, step=1, limit=4
    $region2: #{bottleneck_forward.5} parent=1 // loop_pre_header
      _
    $region3: #{bottleneck_forward.5} parent=1 // loop_header
      %s18 = sphi 0, %s22
      %p19 = scmp.ge.s32.totalorder %s18, 4
      %s28 = sphi 0, %s30
      %s31 = sphi 0, %s28
      %s32 = sphi 0, %s31
      %s48 = sphi 0, %s32
      %s54 = sphi 0, %s56
      %s57 = sphi 0, %s54
      %s58 = sphi 0, %s57
      %s74 = sphi 0, %s58
      %s78 = sphi 0, %s78
      %s80 = sphi 0, %s78
      %s81 = sphi 0, %s80
      %s95 = sphi 0, %s81
      %s99 = sphi 0, %s99
      %s101 = sphi 0, %s99
      %s102 = sphi 0, %s101
      %s116 = sphi 0, %s102
      %s120 = sphi 0, %s120
      %s122 = sphi 0, %s120
      %s123 = sphi 0, %s122
      %s137 = sphi 0, %s123
      %s141 = sphi 0, %s141
      %s143 = sphi 0, %s141
      %s144 = sphi 0, %s143
      %s158 = sphi 0, %s144
      %s162 = sphi 0, %s162
      %s164 = sphi 0, %s162
      %s165 = sphi 0, %s164
      %s179 = sphi 0, %s165
      %s183 = sphi 0, %s183
      %s185 = sphi 0, %s183
      %s186 = sphi 0, %s185
      %s200 = sphi 0, %s186
      %s204 = sphi 0, %s204
      %s206 = sphi 0, %s204
      %s207 = sphi 0, %s206
      %s221 = sphi 0, %s207
      %s227 = sphi 0, %s229
      %s230 = sphi 0, %s227
      %s231 = sphi 0, %s230
      %s247 = sphi 0, %s231
    $region4: #{bottleneck_forward.5} parent=1 // loop_header_branch
      %21 = sbr.rel (%p19) target = $region8
    $region5: #{bottleneck_forward.5} parent=1 // loop_body
      %s23 = ssub.s32 %s18, 1
      %s24 = ssub.s32 %s18, 2
      %s25 = sadd.s32 %s18, 1
      %s26 = ssub.s32 %s18, %s25
      %p27 = scmp.eq.s32.totalorder %s26, 0
      %s29 = sadd.s32 %s28, 1
      %s30 = scalar_select %p27, %s28, %s29
      %p33 = pneg %p27
      %p34 = scmp.eq.s32.totalorder %s18, 1
      %p35 = por %p33, %p34
      %p36 = scmp.ne.s32.totalorder %s28, %s31
      %p37 = scmp.eq.s32.totalorder %s18, 0
      %p38 = por %p36, %p37
      %p39 = scmp.ne.s32.totalorder %s28, %s31
      %p40 = scmp.eq.s32.totalorder %s23, 1
      %p41 = por %p39, %p40
      %p42 = scmp.ne.s32.totalorder %s31, %s32
      %p43 = scmp.eq.s32.totalorder %s23, 0
      %p44 = por %p42, %p43
      %p45 = scmp.ne.s32.totalorder %s31, %s32
      %p46 = scmp.eq.s32.totalorder %s24, 1
      %p47 = por %p45, %p46
      %p49 = scmp.ne.s32.totalorder %s32, %s48
      %p50 = scmp.eq.s32.totalorder %s24, 0
      %p51 = por %p49, %p50
      %s52 = ssub.s32 %s18, %s25
      %p53 = scmp.eq.s32.totalorder %s52, 0
      %s55 = sadd.s32 %s54, 1
      %s56 = scalar_select %p53, %s54, %s55
      %p59 = pneg %p53
      %p60 = scmp.eq.s32.totalorder %s18, 1
      %p61 = por %p59, %p60
      %p62 = scmp.ne.s32.totalorder %s54, %s57
      %p63 = scmp.eq.s32.totalorder %s18, 0
      %p64 = por %p62, %p63
      %p65 = scmp.ne.s32.totalorder %s54, %s57
      %p66 = scmp.eq.s32.totalorder %s23, 1
      %p67 = por %p65, %p66
      %p68 = scmp.ne.s32.totalorder %s57, %s58
      %p69 = scmp.eq.s32.totalorder %s23, 0
      %p70 = por %p68, %p69
      %p71 = scmp.ne.s32.totalorder %s57, %s58
      %p72 = scmp.eq.s32.totalorder %s24, 1
      %p73 = por %p71, %p72
      %p75 = scmp.ne.s32.totalorder %s58, %s74
      %p76 = scmp.eq.s32.totalorder %s24, 0
      %p77 = por %p75, %p76
      %s79 = sadd.s32 %s78, 1
      %p82 = scmp.eq.s32.totalorder %s18, 1
      %p83 = scmp.ne.s32.totalorder %s78, %s80
      %p84 = scmp.eq.s32.totalorder %s18, 0
      %p85 = por %p83, %p84
      %p86 = scmp.ne.s32.totalorder %s78, %s80
      %p87 = scmp.eq.s32.totalorder %s23, 1
      %p88 = por %p86, %p87
      %p89 = scmp.ne.s32.totalorder %s80, %s81
      %p90 = scmp.eq.s32.totalorder %s23, 0
      %p91 = por %p89, %p90
      %p92 = scmp.ne.s32.totalorder %s80, %s81
      %p93 = scmp.eq.s32.totalorder %s24, 1
      %p94 = por %p92, %p93
      %p96 = scmp.ne.s32.totalorder %s81, %s95
      %p97 = scmp.eq.s32.totalorder %s24, 0
      %p98 = por %p96, %p97
      %s100 = sadd.s32 %s99, 1
      %p103 = scmp.eq.s32.totalorder %s18, 1
      %p104 = scmp.ne.s32.totalorder %s99, %s101
      %p105 = scmp.eq.s32.totalorder %s18, 0
      %p106 = por %p104, %p105
      %p107 = scmp.ne.s32.totalorder %s99, %s101
      %p108 = scmp.eq.s32.totalorder %s23, 1
      %p109 = por %p107, %p108
      %p110 = scmp.ne.s32.totalorder %s101, %s102
      %p111 = scmp.eq.s32.totalorder %s23, 0
      %p112 = por %p110, %p111
      %p113 = scmp.ne.s32.totalorder %s101, %s102
      %p114 = scmp.eq.s32.totalorder %s24, 1
      %p115 = por %p113, %p114
      %p117 = scmp.ne.s32.totalorder %s102, %s116
      %p118 = scmp.eq.s32.totalorder %s24, 0
      %p119 = por %p117, %p118
      %s121 = sadd.s32 %s120, 1
      %p124 = scmp.eq.s32.totalorder %s18, 1
      %p125 = scmp.ne.s32.totalorder %s120, %s122
      %p126 = scmp.eq.s32.totalorder %s18, 0
      %p127 = por %p125, %p126
      %p128 = scmp.ne.s32.totalorder %s120, %s122
      %p129 = scmp.eq.s32.totalorder %s23, 1
      %p130 = por %p128, %p129
      %p131 = scmp.ne.s32.totalorder %s122, %s123
      %p132 = scmp.eq.s32.totalorder %s23, 0
      %p133 = por %p131, %p132
      %p134 = scmp.ne.s32.totalorder %s122, %s123
      %p135 = scmp.eq.s32.totalorder %s24, 1
      %p136 = por %p134, %p135
      %p138 = scmp.ne.s32.totalorder %s123, %s137
      %p139 = scmp.eq.s32.totalorder %s24, 0
      %p140 = por %p138, %p139
      %s142 = sadd.s32 %s141, 1
      %p145 = scmp.eq.s32.totalorder %s18, 1
      %p146 = scmp.ne.s32.totalorder %s141, %s143
      %p147 = scmp.eq.s32.totalorder %s18, 0
      %p148 = por %p146, %p147
      %p149 = scmp.ne.s32.totalorder %s141, %s143
      %p150 = scmp.eq.s32.totalorder %s23, 1
      %p151 = por %p149, %p150
      %p152 = scmp.ne.s32.totalorder %s143, %s144
      %p153 = scmp.eq.s32.totalorder %s23, 0
      %p154 = por %p152, %p153
      %p155 = scmp.ne.s32.totalorder %s143, %s144
      %p156 = scmp.eq.s32.totalorder %s24, 1
      %p157 = por %p155, %p156
      %p159 = scmp.ne.s32.totalorder %s144, %s158
      %p160 = scmp.eq.s32.totalorder %s24, 0
      %p161 = por %p159, %p160
      %s163 = sadd.s32 %s162, 1
      %p166 = scmp.eq.s32.totalorder %s18, 1
      %p167 = scmp.ne.s32.totalorder %s162, %s164
      %p168 = scmp.eq.s32.totalorder %s18, 0
      %p169 = por %p167, %p168
      %p170 = scmp.ne.s32.totalorder %s162, %s164
      %p171 = scmp.eq.s32.totalorder %s23, 1
      %p172 = por %p170, %p171
      %p173 = scmp.ne.s32.totalorder %s164, %s165
      %p174 = scmp.eq.s32.totalorder %s23, 0
      %p175 = por %p173, %p174
      %p176 = scmp.ne.s32.totalorder %s164, %s165
      %p177 = scmp.eq.s32.totalorder %s24, 1
      %p178 = por %p176, %p177
      %p180 = scmp.ne.s32.totalorder %s165, %s179
      %p181 = scmp.eq.s32.totalorder %s24, 0
      %p182 = por %p180, %p181
      %s184 = sadd.s32 %s183, 1
      %p187 = scmp.eq.s32.totalorder %s18, 1
      %p188 = scmp.ne.s32.totalorder %s183, %s185
      %p189 = scmp.eq.s32.totalorder %s18, 0
      %p190 = por %p188, %p189
      %p191 = scmp.ne.s32.totalorder %s183, %s185
      %p192 = scmp.eq.s32.totalorder %s23, 1
      %p193 = por %p191, %p192
      %p194 = scmp.ne.s32.totalorder %s185, %s186
      %p195 = scmp.eq.s32.totalorder %s23, 0
      %p196 = por %p194, %p195
      %p197 = scmp.ne.s32.totalorder %s185, %s186
      %p198 = scmp.eq.s32.totalorder %s24, 1
      %p199 = por %p197, %p198
      %p201 = scmp.ne.s32.totalorder %s186, %s200
      %p202 = scmp.eq.s32.totalorder %s24, 0
      %p203 = por %p201, %p202
      %s205 = sadd.s32 %s204, 1
      %p208 = scmp.eq.s32.totalorder %s18, 1
      %p209 = scmp.ne.s32.totalorder %s204, %s206
      %p210 = scmp.eq.s32.totalorder %s18, 0
      %p211 = por %p209, %p210
      %p212 = scmp.ne.s32.totalorder %s204, %s206
      %p213 = scmp.eq.s32.totalorder %s23, 1
      %p214 = por %p212, %p213
      %p215 = scmp.ne.s32.totalorder %s206, %s207
      %p216 = scmp.eq.s32.totalorder %s23, 0
      %p217 = por %p215, %p216
      %p218 = scmp.ne.s32.totalorder %s206, %s207
      %p219 = scmp.eq.s32.totalorder %s24, 1
      %p220 = por %p218, %p219
      %p222 = scmp.ne.s32.totalorder %s207, %s221
      %p223 = scmp.eq.s32.totalorder %s24, 0
      %p224 = por %p222, %p223
      %s225 = ssub.s32 %s18, %s25
      %p226 = scmp.eq.s32.totalorder %s225, 0
      %s228 = sadd.s32 %s227, 1
      %s229 = scalar_select %p226, %s227, %s228
      %p232 = pneg %p226
      %p233 = scmp.eq.s32.totalorder %s18, 1
      %p234 = por %p232, %p233
      %p235 = scmp.ne.s32.totalorder %s227, %s230
      %p236 = scmp.eq.s32.totalorder %s18, 0
      %p237 = por %p235, %p236
      %p238 = scmp.ne.s32.totalorder %s227, %s230
      %p239 = scmp.eq.s32.totalorder %s23, 1
      %p240 = por %p238, %p239
      %p241 = scmp.ne.s32.totalorder %s230, %s231
      %p242 = scmp.eq.s32.totalorder %s23, 0
      %p243 = por %p241, %p242
      %p244 = scmp.ne.s32.totalorder %s230, %s231
      %p245 = scmp.eq.s32.totalorder %s24, 1
      %p246 = por %p244, %p245
      %p248 = scmp.ne.s32.totalorder %s231, %s247
      %p249 = scmp.eq.s32.totalorder %s24, 0
      %p250 = por %p248, %p249
      %p251 = scmp.le.s32.totalorder 1, %s18
      %p252 = scmp.lt.s32.totalorder %s18, 3
      %p253 = pnand %p251, %p252
      %p254 = pneg %p253
      // Predicated region
      $region9: #{bottleneck_forward.5} parent=5 // pred_check
        _
      $region10: #{bottleneck_forward.5} parent=5 // pred_check_branch
        %256 = sbr.rel (%p253) target = $region12
      $region11: #{bottleneck_forward.5} parent=5 // pred_region
        %s257 = ssub.s32 %s18, 1
        // Predicated region
        $region13: #{bottleneck_forward.5} parent=11 // pred_check
          %p258 = pneg %p91
        $region14: #{bottleneck_forward.5} parent=11 // pred_check_branch
          %260 = sbr.rel (%p258) target = $region16
        $region15: #{bottleneck_forward.5} parent=11 // pred_region
          _
        $region16: #{bottleneck_forward.5} parent=11 // pred_fallthru
          _
        // Predicated region
        $region17: #{bottleneck_forward.5} parent=11 // pred_check
          %p261 = pneg %p112
        $region18: #{bottleneck_forward.5} parent=11 // pred_check_branch
          %263 = sbr.rel (%p261) target = $region20
        $region19: #{bottleneck_forward.5} parent=11 // pred_region
          _
        $region20: #{bottleneck_forward.5} parent=11 // pred_fallthru
          _
        // Predicated region
        $region21: #{bottleneck_forward.5} parent=11 // pred_check
          %p264 = pneg %p133
        $region22: #{bottleneck_forward.5} parent=11 // pred_check_branch
          %266 = sbr.rel (%p264) target = $region24
        $region23: #{bottleneck_forward.5} parent=11 // pred_region
          _
        $region24: #{bottleneck_forward.5} parent=11 // pred_fallthru
          _
        // Predicated region
        $region25: #{bottleneck_forward.5} parent=11 // pred_check
          %p267 = pneg %p154
        $region26: #{bottleneck_forward.5} parent=11 // pred_check_branch
          %269 = sbr.rel (%p267) target = $region28
        $region27: #{bottleneck_forward.5} parent=11 // pred_region
          _
        $region28: #{bottleneck_forward.5} parent=11 // pred_fallthru
          _
        // Predicated region
        $region29: #{bottleneck_forward.5} parent=11 // pred_check
          %p270 = pneg %p175
        $region30: #{bottleneck_forward.5} parent=11 // pred_check_branch
          %272 = sbr.rel (%p270) target = $region32
        $region31: #{bottleneck_forward.5} parent=11 // pred_region
          _
        $region32: #{bottleneck_forward.5} parent=11 // pred_fallthru
          _
        // Predicated region
        $region33: #{bottleneck_forward.5} parent=11 // pred_check
          %p273 = pneg %p196
        $region34: #{bottleneck_forward.5} parent=11 // pred_check_branch
          %275 = sbr.rel (%p273) target = $region36
        $region35: #{bottleneck_forward.5} parent=11 // pred_region
          _
        $region36: #{bottleneck_forward.5} parent=11 // pred_fallthru
          _
        // Predicated region
        $region37: #{bottleneck_forward.5} parent=11 // pred_check
          %p276 = pneg %p217
        $region38: #{bottleneck_forward.5} parent=11 // pred_check_branch
          %278 = sbr.rel (%p276) target = $region40
        $region39: #{bottleneck_forward.5} parent=11 // pred_region
          _
        $region40: #{bottleneck_forward.5} parent=11 // pred_fallthru
          _
      $region12: #{bottleneck_forward.5} parent=5 // pred_fallthru
        _
      %p279 = scmp.lt.s32.totalorder %s18, 2
      // Predicated region
      $region41: #{bottleneck_forward.5} parent=5 // pred_check
        %p280 = pneg %p279
      $region42: #{bottleneck_forward.5} parent=5 // pred_check_branch
        %282 = sbr.rel (%p280) target = $region44
      $region43: #{bottleneck_forward.5} parent=5 // pred_region
        // Predicated region
        $region45: #{bottleneck_forward.5} parent=43 // pred_check
          %p283 = pneg %p38
        $region46: #{bottleneck_forward.5} parent=43 // pred_check_branch
          %285 = sbr.rel (%p283) target = $region48
        $region47: #{bottleneck_forward.5} parent=43 // pred_region
          %p286 = scmp.lt.s32.totalorder %s18, 1
          %s287 = scalar_select %p286, %s18, 1
          %s288 = smul.addr %s287, 8
          %s289 = smul.addr %s288, 4
          %s290 = scalar_lea.vmem %s0, %s289
        $region48: #{bottleneck_forward.5} parent=43 // pred_fallthru
          _
        // Predicated region
        $region49: #{bottleneck_forward.5} parent=43 // pred_check
          %p291 = pneg %p64
        $region50: #{bottleneck_forward.5} parent=43 // pred_check_branch
          %293 = sbr.rel (%p291) target = $region52
        $region51: #{bottleneck_forward.5} parent=43 // pred_region
          %p294 = scmp.lt.s32.totalorder %s18, 1
          %s295 = scalar_select %p294, %s18, 1
          %s296 = smul.addr %s295, 8
          %s297 = smul.addr %s296, 4
          %s298 = scalar_lea.vmem %s1, %s297
        $region52: #{bottleneck_forward.5} parent=43 // pred_fallthru
          _
      $region44: #{bottleneck_forward.5} parent=5 // pred_fallthru
        _
      %p299 = scmp.le.s32.totalorder 1, %s18
      %p300 = scmp.lt.s32.totalorder %s18, 3
      %p301 = pnand %p299, %p300
      %p302 = pneg %p301
      // Predicated region
      $region53: #{bottleneck_forward.5} parent=5 // pred_check
        _
      $region54: #{bottleneck_forward.5} parent=5 // pred_check_branch
        %304 = sbr.rel (%p301) target = $region56
      $region55: #{bottleneck_forward.5} parent=5 // pred_region
        %s305 = ssub.s32 %s18, 1
        %p306 = scmp.lt.s32.totalorder %s23, 1
        %s307 = scalar_select %p306, %s23, 1
        %s308 = smul.addr %s307, 8
        %s309 = smul.addr %s308, 4
        %s310 = scalar_lea.vmem %s0, %s309
        %p311 = pneg %p44
        %p312 = pneg %p41
        %p313 = scmp.lt.s32.totalorder %s23, 1
        %s314 = scalar_select %p313, %s23, 1
        %s315 = smul.addr %s314, 8
        %s316 = smul.addr %s315, 4
        %s317 = scalar_lea.vmem %s1, %s316
        %p318 = pneg %p70
        %p319 = pneg %p67
        %p320 = pneg %p91
        %p321 = pneg %p88
        %p322 = pneg %p112
        %p323 = pneg %p109
        %p324 = pneg %p133
        %p325 = pneg %p130
        %p326 = pneg %p154
        %p327 = pneg %p151
        %p328 = pneg %p175
        %p329 = pneg %p172
        %p330 = pneg %p196
        %p331 = pneg %p193
        %p332 = pneg %p217
        %p333 = pneg %p214
        %p334 = pneg %p243
        %p335 = pneg %p240
        %s336 = sand.u32 %s230, 1
        %s337 = scalar_lea.sflag [#allocation3], %s336
        %s338 = sand.u32 %s230, 1
        %s339 = smul.addr %s338, 64
        %s340 = scalar_lea.vmem [#allocation2], %s339
        %p341 = scmp.lt.s32.totalorder %s23, 1
        %s342 = scalar_select %p341, %s23, 1
        %s343 = smul.addr %s342, 8
        %s344 = smul.addr %s343, 4
        %s345 = scalar_lea.vmem %s0, %s344
        %p346 = scmp.lt.s32.totalorder %s23, 1
        %s347 = scalar_select %p346, %s23, 1
        %s348 = smul.addr %s347, 8
        %s349 = smul.addr %s348, 4
        %s350 = scalar_lea.vmem %s1, %s349
        %v352 = vld [vmem:[%s345] sm:$0xf]
        %v353 = vld [vmem:[%s345 + $0x4] sm:$0xf]
        %v354 = vld [vmem:[%s345 + $0x8] sm:$0xf]
        %v355 = vld [vmem:[%s345 + $0xc] sm:$0xf]
        %v356 = vld [vmem:[%s345 + $0x10] sm:$0xf]
        %v357 = vld [vmem:[%s345 + $0x14] sm:$0xf]
        %v358 = vld [vmem:[%s345 + $0x18] sm:$0xf]
        %v359 = vld [vmem:[%s345 + $0x1c] sm:$0xf]
        %v360 = vld [vmem:[%s2] sm:$0xf]
        %v361 = vld [vmem:[%s2 + $0x4] sm:$0xf]
        %v370 = vunpack.c.l.b16 %v352
        %v371 = vunpack.c.l.b16 %v353
        %v372 = vunpack.c.l.b16 %v354
        %v373 = vunpack.c.l.b16 %v355
        %v374 = vunpack.c.l.b16 %v356
        %v375 = vunpack.c.l.b16 %v357
        %v376 = vunpack.c.l.b16 %v358
        %v377 = vunpack.c.l.b16 %v359
        %v378 = vpack.c.b16 %v371, %v370
        %v379 = vpack.c.b16 %v373, %v372
        %v380 = vpack.c.b16 %v375, %v374
        %v381 = vpack.c.b16 %v377, %v376
        %v384 = vunpack.c.l.b16 %v360
        %v385 = vunpack.c.l.b16 %v361
        %v386 = vpack.c.b16 %v385, %v384
        %vm388 = vcmask 130048
        %v390 = vsel %vm388, %v378, 0
        %v393 = vsel %vm388, %v379, 0
        %v396 = vsel %vm388, %v380, 0
        %v399 = vsel %vm388, %v381, 0
        %401 = vmatprep.subr.bf16.mxu0 0
        %402 = vmatpush1.bf16.msra.mxu0 %v386
        %403 = vmatprep.subr.bf16.mxu0 0
        %404 = vmatpush1.bf16.msra.mxu0 0
        %405 = vmatprep.subr.bf16.mxu0 0
        %406 = vmatpush1.bf16.msra.mxu0 0
        %407 = vmatprep.subr.bf16.mxu0 0
        %408 = vmatpush1.bf16.msra.mxu0 0
        %409 = vmatprep.subr.bf16.mxu0 0
        %410 = vmatpush1.bf16.msra.mxu0 0
        %411 = vmatprep.subr.bf16.mxu0 0
        %412 = vmatpush1.bf16.msra.mxu0 0
        %413 = vmatprep.subr.bf16.mxu0 0
        %414 = vmatpush1.bf16.msra.mxu0 0
        %415 = vmatprep.subr.bf16.mxu0 0
        %416 = vmatpush1.bf16.msra.mxu0 0
        %417 = vmatprep.subr.bf16.mxu0 0
        %418 = vmatpush1.bf16.msra.mxu0 0
        %419 = vmatprep.subr.bf16.mxu0 0
        %420 = vmatpush1.bf16.msra.mxu0 0
        %421 = vmatprep.subr.bf16.mxu0 0
        %422 = vmatpush1.bf16.msra.mxu0 0
        %423 = vmatprep.subr.bf16.mxu0 0
        %424 = vmatpush1.bf16.msra.mxu0 0
        %425 = vmatprep.subr.bf16.mxu0 0
        %426 = vmatpush1.bf16.msra.mxu0 0
        %427 = vmatprep.subr.bf16.mxu0 0
        %428 = vmatpush1.bf16.msra.mxu0 0
        %429 = vmatprep.subr.bf16.mxu0 0
        %430 = vmatpush1.bf16.msra.mxu0 0
        %431 = vmatprep.subr.bf16.mxu0 0
        %432 = vmatpush1.bf16.msra.mxu0 0
        %433 = vmatprep.mubr.bf16.mxu0 0
        %434 = vmatmul.mubr.bf16.gmra.mrb[0].mxu0 %v390
        %v435 = vpop.f32.mrb[0].mxu0
        %v436 = vadd.f32 0.0, %v435
        %v437 = vpop.f32.mrb[0].mxu0
        %v438 = vpop.f32.mrb[0].mxu0
        %v439 = vadd.f32 0.0, %v438
        %v440 = vpop.f32.mrb[0].mxu0
        %441 = vmatprep.mubr.bf16.mxu0 0
        %442 = vmatmul.mubr.bf16.gmra.mrb[0].mxu0 %v393
        %v443 = vpop.f32.mrb[0].mxu0
        %v444 = vadd.f32 0.0, %v443
        %v445 = vpop.f32.mrb[0].mxu0
        %v446 = vpop.f32.mrb[0].mxu0
        %v447 = vadd.f32 0.0, %v446
        %v448 = vpop.f32.mrb[0].mxu0
        %449 = vmatprep.mubr.bf16.mxu0 0
        %450 = vmatmul.mubr.bf16.gmra.mrb[0].mxu0 %v396
        %v451 = vpop.f32.mrb[0].mxu0
        %v452 = vadd.f32 0.0, %v451
        %v453 = vpop.f32.mrb[0].mxu0
        %v454 = vpop.f32.mrb[0].mxu0
        %v455 = vadd.f32 0.0, %v454
        %v456 = vpop.f32.mrb[0].mxu0
        %457 = vmatprep.mubr.bf16.mxu0 0
        %458 = vmatmul.mubr.bf16.gmra.mrb[0].mxu0 %v399
        %v459 = vpop.f32.mrb[0].mxu0
        %v460 = vadd.f32 0.0, %v459
        %v461 = vpop.f32.mrb[0].mxu0
        %v462 = vpop.f32.mrb[0].mxu0
        %v463 = vadd.f32 0.0, %v462
        %v464 = vpop.f32.mrb[0].mxu0
        %465 = vdwg.mxu0
        %v466 = vld [vmem:[%s4] sm:$0x1]
        %v467 = vld [vmem:[%s5] sm:$0x1]
        %v468 = vld [vmem:[%s8] sm:$0xff]
        %v469 = vld [vmem:[%s8 + $0x8] sm:$0xff]
        %v470 = vld [vmem:[%s8 + $0x10] sm:$0xff]
        %v471 = vld [vmem:[%s8 + $0x18] sm:$0xff]
        %v472 = vld [vmem:[%s8 + $0x20] sm:$0xff]
        %v473 = vld [vmem:[%s8 + $0x28] sm:$0xff]
        %v474 = vld [vmem:[%s8 + $0x30] sm:$0xff]
        %v475 = vld [vmem:[%s8 + $0x38] sm:$0xff]
        %vm476 = vcmask 523264
        %v477 = vsel %vm476, %v436, 0.0
        %v478 = vsel %vm476, %v439, 0.0
        %v479 = vadd.f32 %v477, %v478
        %v480 = vsel %vm476, %v444, 0.0
        %v481 = vadd.f32 %v479, %v480
        %v482 = vsel %vm476, %v447, 0.0
        %v483 = vadd.f32 %v481, %v482
        %v484 = vsel %vm476, %v452, 0.0
        %v485 = vadd.f32 %v483, %v484
        %v486 = vsel %vm476, %v455, 0.0
        %v487 = vadd.f32 %v485, %v486
        %v488 = vsel %vm476, %v460, 0.0
        %v489 = vadd.f32 %v487, %v488
        %v490 = vsel %vm476, %v463, 0.0
        %v491 = vadd.f32 %v489, %v490
        %v492 = vrot.slane %v491, 4
        %v493 = vadd.f32 %v491, %v492
        %v494 = vrot.slane %v493, 2
        %v495 = vadd.f32 %v493, %v494
        %v496 = vrot.slane %v495, 1
        %v497 = vadd.f32 %v495, %v496
        %v498 = vmul.f32 %v436, %v436
        %v499 = vmul.f32 %v439, %v439
        %v500 = vmul.f32 %v444, %v444
        %v501 = vmul.f32 %v447, %v447
        %v502 = vmul.f32 %v452, %v452
        %v503 = vmul.f32 %v455, %v455
        %v504 = vmul.f32 %v460, %v460
        %v505 = vmul.f32 %v463, %v463
        %v506 = vsel %vm476, %v498, 0.0
        %v507 = vsel %vm476, %v499, 0.0
        %v508 = vadd.f32 %v506, %v507
        %v509 = vsel %vm476, %v500, 0.0
        %v510 = vadd.f32 %v508, %v509
        %v511 = vsel %vm476, %v501, 0.0
        %v512 = vadd.f32 %v510, %v511
        %v513 = vsel %vm476, %v502, 0.0
        %v514 = vadd.f32 %v512, %v513
        %v515 = vsel %vm476, %v503, 0.0
        %v516 = vadd.f32 %v514, %v515
        %v517 = vsel %vm476, %v504, 0.0
        %v518 = vadd.f32 %v516, %v517
        %v519 = vsel %vm476, %v505, 0.0
        %v520 = vadd.f32 %v518, %v519
        %v521 = vrot.slane %v520, 4
        %v522 = vadd.f32 %v520, %v521
        %v523 = vrot.slane %v522, 2
        %v524 = vadd.f32 %v522, %v523
        %v525 = vrot.slane %v524, 1
        %v526 = vadd.f32 %v524, %v525
        %v528 = vsel %vm476, %v497, 0
        %530 = vmatprep.subr.mxu0 0.0
        %531 = vmatpush1.msra.mxu0 %v468
        %532 = vmatprep.subr.mxu0 0.0
        %533 = vmatpush1.msra.mxu0 %v469
        %534 = vmatprep.subr.mxu0 0.0
        %535 = vmatpush1.msra.mxu0 %v470
        %536 = vmatprep.subr.mxu0 0.0
        %537 = vmatpush1.msra.mxu0 %v471
        %538 = vmatprep.subr.mxu0 0.0
        %539 = vmatpush1.msra.mxu0 %v472
        %540 = vmatprep.subr.mxu0 0.0
        %541 = vmatpush1.msra.mxu0 %v473
        %542 = vmatprep.subr.mxu0 0.0
        %543 = vmatpush1.msra.mxu0 %v474
        %544 = vmatprep.subr.mxu0 0.0
        %545 = vmatpush1.msra.mxu0 %v475
        %546 = vmatprep.subr.mxu0 0.0
        %547 = vmatpush1.msra.mxu0 0.0
        %548 = vmatprep.subr.mxu0 0.0
        %549 = vmatpush1.msra.mxu0 0.0
        %550 = vmatprep.subr.mxu0 0.0
        %551 = vmatpush1.msra.mxu0 0.0
        %552 = vmatprep.subr.mxu0 0.0
        %553 = vmatpush1.msra.mxu0 0.0
        %554 = vmatprep.subr.mxu0 0.0
        %555 = vmatpush1.msra.mxu0 0.0
        %556 = vmatprep.subr.mxu0 0.0
        %557 = vmatpush1.msra.mxu0 0.0
        %558 = vmatprep.subr.mxu0 0.0
        %559 = vmatpush1.msra.mxu0 0.0
        %560 = vmatprep.subr.mxu0 0.0
        %561 = vmatpush1.msra.mxu0 0.0
        %562 = vmatprep.subr.mxu0 0.0
        %563 = vmatpush1.msra.mxu0 0.0
        %564 = vmatprep.subr.mxu0 0.0
        %565 = vmatpush1.msra.mxu0 0.0
        %566 = vmatprep.subr.mxu0 0.0
        %567 = vmatpush1.msra.mxu0 0.0
        %568 = vmatprep.subr.mxu0 0.0
        %569 = vmatpush1.msra.mxu0 0.0
        %570 = vmatprep.subr.mxu0 0.0
        %571 = vmatpush1.msra.mxu0 0.0
        %572 = vmatprep.subr.mxu0 0.0
        %573 = vmatpush1.msra.mxu0 0.0
        %574 = vmatprep.subr.mxu0 0.0
        %575 = vmatpush1.msra.mxu0 0.0
        %576 = vmatprep.subr.mxu0 0.0
        %577 = vmatpush1.msra.mxu0 0.0
        %578 = vmatprep.subr.mxu0 0.0
        %579 = vmatpush1.msra.mxu0 0.0
        %580 = vmatprep.subr.mxu0 0.0
        %581 = vmatpush1.msra.mxu0 0.0
        %582 = vmatprep.subr.mxu0 0.0
        %583 = vmatpush1.msra.mxu0 0.0
        %584 = vmatprep.subr.mxu0 0.0
        %585 = vmatpush1.msra.mxu0 0.0
        %586 = vmatprep.subr.mxu0 0.0
        %587 = vmatpush1.msra.mxu0 0.0
        %588 = vmatprep.subr.mxu0 0.0
        %589 = vmatpush1.msra.mxu0 0.0
        %590 = vmatprep.subr.mxu0 0.0
        %591 = vmatpush1.msra.mxu0 0.0
        %592 = vmatprep.subr.mxu0 0.0
        %593 = vmatpush1.msra.mxu0 0.0
        %594 = vmatprep.mubr.f32.mxu0 0.0
        %595 = vmatmul.mubr.f32.gmra.mrb[0].mxu0 %v528
        %v596 = vpop.f32.mrb[0].mxu0
        %v597 = vadd.f32 0.0, %v596
        %v598 = vpop.f32.mrb[0].mxu0
        %599 = vdwg.mxu0
        %v600 = vrcp.pop 256.0
        %v601 = vmul.f32 %v597, %v600
        %v603 = vsel %vm476, %v526, 0
        %605 = vmatprep.subr.mxu0 0.0
        %606 = vmatpush1.msra.mxu0 %v468
        %607 = vmatprep.subr.mxu0 0.0
        %608 = vmatpush1.msra.mxu0 %v469
        %609 = vmatprep.subr.mxu0 0.0
        %610 = vmatpush1.msra.mxu0 %v470
        %611 = vmatprep.subr.mxu0 0.0
        %612 = vmatpush1.msra.mxu0 %v471
        %613 = vmatprep.subr.mxu0 0.0
        %614 = vmatpush1.msra.mxu0 %v472
        %615 = vmatprep.subr.mxu0 0.0
        %616 = vmatpush1.msra.mxu0 %v473
        %617 = vmatprep.subr.mxu0 0.0
        %618 = vmatpush1.msra.mxu0 %v474
        %619 = vmatprep.subr.mxu0 0.0
        %620 = vmatpush1.msra.mxu0 %v475
        %621 = vmatprep.subr.mxu0 0.0
        %622 = vmatpush1.msra.mxu0 0.0
        %623 = vmatprep.subr.mxu0 0.0
        %624 = vmatpush1.msra.mxu0 0.0
        %625 = vmatprep.subr.mxu0 0.0
        %626 = vmatpush1.msra.mxu0 0.0
        %627 = vmatprep.subr.mxu0 0.0
        %628 = vmatpush1.msra.mxu0 0.0
        %629 = vmatprep.subr.mxu0 0.0
        %630 = vmatpush1.msra.mxu0 0.0
        %631 = vmatprep.subr.mxu0 0.0
        %632 = vmatpush1.msra.mxu0 0.0
        %633 = vmatprep.subr.mxu0 0.0
        %634 = vmatpush1.msra.mxu0 0.0
        %635 = vmatprep.subr.mxu0 0.0
        %636 = vmatpush1.msra.mxu0 0.0
        %637 = vmatprep.subr.mxu0 0.0
        %638 = vmatpush1.msra.mxu0 0.0
        %639 = vmatprep.subr.mxu0 0.0
        %640 = vmatpush1.msra.mxu0 0.0
        %641 = vmatprep.subr.mxu0 0.0
        %642 = vmatpush1.msra.mxu0 0.0
        %643 = vmatprep.subr.mxu0 0.0
        %644 = vmatpush1.msra.mxu0 0.0
        %645 = vmatprep.subr.mxu0 0.0
        %646 = vmatpush1.msra.mxu0 0.0
        %647 = vmatprep.subr.mxu0 0.0
        %648 = vmatpush1.msra.mxu0 0.0
        %649 = vmatprep.subr.mxu0 0.0
        %650 = vmatpush1.msra.mxu0 0.0
        %651 = vmatprep.subr.mxu0 0.0
        %652 = vmatpush1.msra.mxu0 0.0
        %653 = vmatprep.subr.mxu0 0.0
        %654 = vmatpush1.msra.mxu0 0.0
        %655 = vmatprep.subr.mxu0 0.0
        %656 = vmatpush1.msra.mxu0 0.0
        %657 = vmatprep.subr.mxu0 0.0
        %658 = vmatpush1.msra.mxu0 0.0
        %659 = vmatprep.subr.mxu0 0.0
        %660 = vmatpush1.msra.mxu0 0.0
        %661 = vmatprep.subr.mxu0 0.0
        %662 = vmatpush1.msra.mxu0 0.0
        %663 = vmatprep.subr.mxu0 0.0
        %664 = vmatpush1.msra.mxu0 0.0
        %665 = vmatprep.subr.mxu0 0.0
        %666 = vmatpush1.msra.mxu0 0.0
        %667 = vmatprep.subr.mxu0 0.0
        %668 = vmatpush1.msra.mxu0 0.0
        %669 = vmatprep.mubr.f32.mxu0 0.0
        %670 = vmatmul.mubr.f32.gmra.mrb[0].mxu0 %v603
        %v671 = vpop.f32.mrb[0].mxu0
        %v672 = vadd.f32 0.0, %v671
        %v673 = vpop.f32.mrb[0].mxu0
        %674 = vdwg.mxu0
        %v675 = vmul.f32 %v672, %v600
        %v676 = vmul.f32 %v601, %v601
        %v677 = vsub.f32 %v675, %v676
        %v678 = vadd.f32 %v677, 1e-05
        %v679 = vrsqrt.pop %v678
        %v680 = vlaneseq
        %v681 = vshrl.u32 %v680, 7
        %v682 = vsub.s32 0, %v681
        %v683 = vrot.slane %v601, %v682
        %v684 = vsub.f32 %v436, %v683
        %v685 = vsub.f32 %v439, %v683
        %v686 = vsub.f32 %v444, %v683
        %v687 = vsub.f32 %v447, %v683
        %v688 = vsub.f32 %v452, %v683
        %v689 = vsub.f32 %v455, %v683
        %v690 = vsub.f32 %v460, %v683
        %v691 = vsub.f32 %v463, %v683
        %v692 = vlaneseq
        %v693 = vshrl.u32 %v692, 7
        %v694 = vsub.s32 0, %v693
        %v695 = vrot.slane %v679, %v694
        %v696 = vmul.f32 %v684, %v695
        %v697 = vmul.f32 %v685, %v695
        %v698 = vmul.f32 %v686, %v695
        %v699 = vmul.f32 %v687, %v695
        %v700 = vmul.f32 %v688, %v695
        %v701 = vmul.f32 %v689, %v695
        %v702 = vmul.f32 %v690, %v695
        %v703 = vmul.f32 %v691, %v695
        %v705 = vlaneseq
        %v706 = vshrl.u32 %v705, 7
        %v707 = vsub.s32 0, %v706
        %v708 = vrot.slane %v466, %v707
        %v710 = vmul.f32 %v696, %v708
        %v711 = vmul.f32 %v697, %v708
        %v712 = vmul.f32 %v698, %v708
        %v713 = vmul.f32 %v699, %v708
        %v714 = vmul.f32 %v700, %v708
        %v715 = vmul.f32 %v701, %v708
        %v716 = vmul.f32 %v702, %v708
        %v717 = vmul.f32 %v703, %v708
        %v719 = vlaneseq
        %v720 = vshrl.u32 %v719, 7
        %v721 = vsub.s32 0, %v720
        %v722 = vrot.slane %v467, %v721
        %v724 = vadd.f32 %v710, %v722
        %v725 = vadd.f32 %v711, %v722
        %v726 = vadd.f32 %v712, %v722
        %v727 = vadd.f32 %v713, %v722
        %v728 = vadd.f32 %v714, %v722
        %v729 = vadd.f32 %v715, %v722
        %v730 = vadd.f32 %v716, %v722
        %v731 = vadd.f32 %v717, %v722
        %v732 = vld [vmem:[%s350] sm:$0xf]
        %v733 = vld [vmem:[%s350 + $0x4] sm:$0xf]
        %v734 = vld [vmem:[%s350 + $0x8] sm:$0xf]
        %v735 = vld [vmem:[%s350 + $0xc] sm:$0xf]
        %v736 = vld [vmem:[%s350 + $0x10] sm:$0xf]
        %v737 = vld [vmem:[%s350 + $0x14] sm:$0xf]
        %v738 = vld [vmem:[%s350 + $0x18] sm:$0xf]
        %v739 = vld [vmem:[%s350 + $0x1c] sm:$0xf]
        %v740 = vld [vmem:[%s3] sm:$0xf]
        %v741 = vld [vmem:[%s3 + $0x4] sm:$0xf]
        %v750 = vunpack.c.l.b16 %v732
        %v751 = vunpack.c.l.b16 %v733
        %v752 = vunpack.c.l.b16 %v734
        %v753 = vunpack.c.l.b16 %v735
        %v754 = vunpack.c.l.b16 %v736
        %v755 = vunpack.c.l.b16 %v737
        %v756 = vunpack.c.l.b16 %v738
        %v757 = vunpack.c.l.b16 %v739
        %v758 = vpack.c.b16 %v751, %v750
        %v759 = vpack.c.b16 %v753, %v752
        %v760 = vpack.c.b16 %v755, %v754
        %v761 = vpack.c.b16 %v757, %v756
        %v764 = vunpack.c.l.b16 %v740
        %v765 = vunpack.c.l.b16 %v741
        %v766 = vpack.c.b16 %v765, %v764
        %v769 = vsel %vm388, %v758, 0
        %v772 = vsel %vm388, %v759, 0
        %v775 = vsel %vm388, %v760, 0
        %v778 = vsel %vm388, %v761, 0
        %780 = vmatprep.subr.bf16.mxu0 0
        %781 = vmatpush1.bf16.msra.mxu0 %v766
        %782 = vmatprep.subr.bf16.mxu0 0
        %783 = vmatpush1.bf16.msra.mxu0 0
        %784 = vmatprep.subr.bf16.mxu0 0
        %785 = vmatpush1.bf16.msra.mxu0 0
        %786 = vmatprep.subr.bf16.mxu0 0
        %787 = vmatpush1.bf16.msra.mxu0 0
        %788 = vmatprep.subr.bf16.mxu0 0
        %789 = vmatpush1.bf16.msra.mxu0 0
        %790 = vmatprep.subr.bf16.mxu0 0
        %791 = vmatpush1.bf16.msra.mxu0 0
        %792 = vmatprep.subr.bf16.mxu0 0
        %793 = vmatpush1.bf16.msra.mxu0 0
        %794 = vmatprep.subr.bf16.mxu0 0
        %795 = vmatpush1.bf16.msra.mxu0 0
        %796 = vmatprep.subr.bf16.mxu0 0
        %797 = vmatpush1.bf16.msra.mxu0 0
        %798 = vmatprep.subr.bf16.mxu0 0
        %799 = vmatpush1.bf16.msra.mxu0 0
        %800 = vmatprep.subr.bf16.mxu0 0
        %801 = vmatpush1.bf16.msra.mxu0 0
        %802 = vmatprep.subr.bf16.mxu0 0
        %803 = vmatpush1.bf16.msra.mxu0 0
        %804 = vmatprep.subr.bf16.mxu0 0
        %805 = vmatpush1.bf16.msra.mxu0 0
        %806 = vmatprep.subr.bf16.mxu0 0
        %807 = vmatpush1.bf16.msra.mxu0 0
        %808 = vmatprep.subr.bf16.mxu0 0
        %809 = vmatpush1.bf16.msra.mxu0 0
        %810 = vmatprep.subr.bf16.mxu0 0
        %811 = vmatpush1.bf16.msra.mxu0 0
        %812 = vmatprep.mubr.bf16.mxu0 0
        %813 = vmatmul.mubr.bf16.gmra.mrb[0].mxu0 %v769
        %v814 = vpop.f32.mrb[0].mxu0
        %v815 = vadd.f32 0.0, %v814
        %v816 = vpop.f32.mrb[0].mxu0
        %v817 = vpop.f32.mrb[0].mxu0
        %v818 = vadd.f32 0.0, %v817
        %v819 = vpop.f32.mrb[0].mxu0
        %820 = vmatprep.mubr.bf16.mxu0 0
        %821 = vmatmul.mubr.bf16.gmra.mrb[0].mxu0 %v772
        %v822 = vpop.f32.mrb[0].mxu0
        %v823 = vadd.f32 0.0, %v822
        %v824 = vpop.f32.mrb[0].mxu0
        %v825 = vpop.f32.mrb[0].mxu0
        %v826 = vadd.f32 0.0, %v825
        %v827 = vpop.f32.mrb[0].mxu0
        %828 = vmatprep.mubr.bf16.mxu0 0
        %829 = vmatmul.mubr.bf16.gmra.mrb[0].mxu0 %v775
        %v830 = vpop.f32.mrb[0].mxu0
        %v831 = vadd.f32 0.0, %v830
        %v832 = vpop.f32.mrb[0].mxu0
        %v833 = vpop.f32.mrb[0].mxu0
        %v834 = vadd.f32 0.0, %v833
        %v835 = vpop.f32.mrb[0].mxu0
        %836 = vmatprep.mubr.bf16.mxu0 0
        %837 = vmatmul.mubr.bf16.gmra.mrb[0].mxu0 %v778
        %v838 = vpop.f32.mrb[0].mxu0
        %v839 = vadd.f32 0.0, %v838
        %v840 = vpop.f32.mrb[0].mxu0
        %v841 = vpop.f32.mrb[0].mxu0
        %v842 = vadd.f32 0.0, %v841
        %v843 = vpop.f32.mrb[0].mxu0
        %844 = vdwg.mxu0
        %v845 = vld [vmem:[%s6] sm:$0x1]
        %v846 = vld [vmem:[%s7] sm:$0x1]
        %v847 = vsel %vm476, %v815, 0.0
        %v848 = vsel %vm476, %v818, 0.0
        %v849 = vadd.f32 %v847, %v848
        %v850 = vsel %vm476, %v823, 0.0
        %v851 = vadd.f32 %v849, %v850
        %v852 = vsel %vm476, %v826, 0.0
        %v853 = vadd.f32 %v851, %v852
        %v854 = vsel %vm476, %v831, 0.0
        %v855 = vadd.f32 %v853, %v854
        %v856 = vsel %vm476, %v834, 0.0
        %v857 = vadd.f32 %v855, %v856
        %v858 = vsel %vm476, %v839, 0.0
        %v859 = vadd.f32 %v857, %v858
        %v860 = vsel %vm476, %v842, 0.0
        %v861 = vadd.f32 %v859, %v860
        %v862 = vrot.slane %v861, 4
        %v863 = vadd.f32 %v861, %v862
        %v864 = vrot.slane %v863, 2
        %v865 = vadd.f32 %v863, %v864
        %v866 = vrot.slane %v865, 1
        %v867 = vadd.f32 %v865, %v866
        %v868 = vmul.f32 %v815, %v815
        %v869 = vmul.f32 %v818, %v818
        %v870 = vmul.f32 %v823, %v823
        %v871 = vmul.f32 %v826, %v826
        %v872 = vmul.f32 %v831, %v831
        %v873 = vmul.f32 %v834, %v834
        %v874 = vmul.f32 %v839, %v839
        %v875 = vmul.f32 %v842, %v842
        %v876 = vsel %vm476, %v868, 0.0
        %v877 = vsel %vm476, %v869, 0.0
        %v878 = vadd.f32 %v876, %v877
        %v879 = vsel %vm476, %v870, 0.0
        %v880 = vadd.f32 %v878, %v879
        %v881 = vsel %vm476, %v871, 0.0
        %v882 = vadd.f32 %v880, %v881
        %v883 = vsel %vm476, %v872, 0.0
        %v884 = vadd.f32 %v882, %v883
        %v885 = vsel %vm476, %v873, 0.0
        %v886 = vadd.f32 %v884, %v885
        %v887 = vsel %vm476, %v874, 0.0
        %v888 = vadd.f32 %v886, %v887
        %v889 = vsel %vm476, %v875, 0.0
        %v890 = vadd.f32 %v888, %v889
        %v891 = vrot.slane %v890, 4
        %v892 = vadd.f32 %v890, %v891
        %v893 = vrot.slane %v892, 2
        %v894 = vadd.f32 %v892, %v893
        %v895 = vrot.slane %v894, 1
        %v896 = vadd.f32 %v894, %v895
        %v898 = vsel %vm476, %v867, 0
        %900 = vmatprep.subr.mxu0 0.0
        %901 = vmatpush1.msra.mxu0 %v468
        %902 = vmatprep.subr.mxu0 0.0
        %903 = vmatpush1.msra.mxu0 %v469
        %904 = vmatprep.subr.mxu0 0.0
        %905 = vmatpush1.msra.mxu0 %v470
        %906 = vmatprep.subr.mxu0 0.0
        %907 = vmatpush1.msra.mxu0 %v471
        %908 = vmatprep.subr.mxu0 0.0
        %909 = vmatpush1.msra.mxu0 %v472
        %910 = vmatprep.subr.mxu0 0.0
        %911 = vmatpush1.msra.mxu0 %v473
        %912 = vmatprep.subr.mxu0 0.0
        %913 = vmatpush1.msra.mxu0 %v474
        %914 = vmatprep.subr.mxu0 0.0
        %915 = vmatpush1.msra.mxu0 %v475
        %916 = vmatprep.subr.mxu0 0.0
        %917 = vmatpush1.msra.mxu0 0.0
        %918 = vmatprep.subr.mxu0 0.0
        %919 = vmatpush1.msra.mxu0 0.0
        %920 = vmatprep.subr.mxu0 0.0
        %921 = vmatpush1.msra.mxu0 0.0
        %922 = vmatprep.subr.mxu0 0.0
        %923 = vmatpush1.msra.mxu0 0.0
        %924 = vmatprep.subr.mxu0 0.0
        %925 = vmatpush1.msra.mxu0 0.0
        %926 = vmatprep.subr.mxu0 0.0
        %927 = vmatpush1.msra.mxu0 0.0
        %928 = vmatprep.subr.mxu0 0.0
        %929 = vmatpush1.msra.mxu0 0.0
        %930 = vmatprep.subr.mxu0 0.0
        %931 = vmatpush1.msra.mxu0 0.0
        %932 = vmatprep.subr.mxu0 0.0
        %933 = vmatpush1.msra.mxu0 0.0
        %934 = vmatprep.subr.mxu0 0.0
        %935 = vmatpush1.msra.mxu0 0.0
        %936 = vmatprep.subr.mxu0 0.0
        %937 = vmatpush1.msra.mxu0 0.0
        %938 = vmatprep.subr.mxu0 0.0
        %939 = vmatpush1.msra.mxu0 0.0
        %940 = vmatprep.subr.mxu0 0.0
        %941 = vmatpush1.msra.mxu0 0.0
        %942 = vmatprep.subr.mxu0 0.0
        %943 = vmatpush1.msra.mxu0 0.0
        %944 = vmatprep.subr.mxu0 0.0
        %945 = vmatpush1.msra.mxu0 0.0
        %946 = vmatprep.subr.mxu0 0.0
        %947 = vmatpush1.msra.mxu0 0.0
        %948 = vmatprep.subr.mxu0 0.0
        %949 = vmatpush1.msra.mxu0 0.0
        %950 = vmatprep.subr.mxu0 0.0
        %951 = vmatpush1.msra.mxu0 0.0
        %952 = vmatprep.subr.mxu0 0.0
        %953 = vmatpush1.msra.mxu0 0.0
        %954 = vmatprep.subr.mxu0 0.0
        %955 = vmatpush1.msra.mxu0 0.0
        %956 = vmatprep.subr.mxu0 0.0
        %957 = vmatpush1.msra.mxu0 0.0
        %958 = vmatprep.subr.mxu0 0.0
        %959 = vmatpush1.msra.mxu0 0.0
        %960 = vmatprep.subr.mxu0 0.0
        %961 = vmatpush1.msra.mxu0 0.0
        %962 = vmatprep.subr.mxu0 0.0
        %963 = vmatpush1.msra.mxu0 0.0
        %964 = vmatprep.mubr.f32.mxu0 0.0
        %965 = vmatmul.mubr.f32.gmra.mrb[0].mxu0 %v898
        %v966 = vpop.f32.mrb[0].mxu0
        %v967 = vadd.f32 0.0, %v966
        %v968 = vpop.f32.mrb[0].mxu0
        %969 = vdwg.mxu0
        %v970 = vmul.f32 %v967, %v600
        %v972 = vsel %vm476, %v896, 0
        %974 = vmatprep.subr.mxu0 0.0
        %975 = vmatpush1.msra.mxu0 %v468
        %976 = vmatprep.subr.mxu0 0.0
        %977 = vmatpush1.msra.mxu0 %v469
        %978 = vmatprep.subr.mxu0 0.0
        %979 = vmatpush1.msra.mxu0 %v470
        %980 = vmatprep.subr.mxu0 0.0
        %981 = vmatpush1.msra.mxu0 %v471
        %982 = vmatprep.subr.mxu0 0.0
        %983 = vmatpush1.msra.mxu0 %v472
        %984 = vmatprep.subr.mxu0 0.0
        %985 = vmatpush1.msra.mxu0 %v473
        %986 = vmatprep.subr.mxu0 0.0
        %987 = vmatpush1.msra.mxu0 %v474
        %988 = vmatprep.subr.mxu0 0.0
        %989 = vmatpush1.msra.mxu0 %v475
        %990 = vmatprep.subr.mxu0 0.0
        %991 = vmatpush1.msra.mxu0 0.0
        %992 = vmatprep.subr.mxu0 0.0
        %993 = vmatpush1.msra.mxu0 0.0
        %994 = vmatprep.subr.mxu0 0.0
        %995 = vmatpush1.msra.mxu0 0.0
        %996 = vmatprep.subr.mxu0 0.0
        %997 = vmatpush1.msra.mxu0 0.0
        %998 = vmatprep.subr.mxu0 0.0
        %999 = vmatpush1.msra.mxu0 0.0
        %1000 = vmatprep.subr.mxu0 0.0
        %1001 = vmatpush1.msra.mxu0 0.0
        %1002 = vmatprep.subr.mxu0 0.0
        %1003 = vmatpush1.msra.mxu0 0.0
        %1004 = vmatprep.subr.mxu0 0.0
        %1005 = vmatpush1.msra.mxu0 0.0
        %1006 = vmatprep.subr.mxu0 0.0
        %1007 = vmatpush1.msra.mxu0 0.0
        %1008 = vmatprep.subr.mxu0 0.0
        %1009 = vmatpush1.msra.mxu0 0.0
        %1010 = vmatprep.subr.mxu0 0.0
        %1011 = vmatpush1.msra.mxu0 0.0
        %1012 = vmatprep.subr.mxu0 0.0
        %1013 = vmatpush1.msra.mxu0 0.0
        %1014 = vmatprep.subr.mxu0 0.0
        %1015 = vmatpush1.msra.mxu0 0.0
        %1016 = vmatprep.subr.mxu0 0.0
        %1017 = vmatpush1.msra.mxu0 0.0
        %1018 = vmatprep.subr.mxu0 0.0
        %1019 = vmatpush1.msra.mxu0 0.0
        %1020 = vmatprep.subr.mxu0 0.0
        %1021 = vmatpush1.msra.mxu0 0.0
        %1022 = vmatprep.subr.mxu0 0.0
        %1023 = vmatpush1.msra.mxu0 0.0
        %1024 = vmatprep.subr.mxu0 0.0
        %1025 = vmatpush1.msra.mxu0 0.0
        %1026 = vmatprep.subr.mxu0 0.0
        %1027 = vmatpush1.msra.mxu0 0.0
        %1028 = vmatprep.subr.mxu0 0.0
        %1029 = vmatpush1.msra.mxu0 0.0
        %1030 = vmatprep.subr.mxu0 0.0
        %1031 = vmatpush1.msra.mxu0 0.0
        %1032 = vmatprep.subr.mxu0 0.0
        %1033 = vmatpush1.msra.mxu0 0.0
        %1034 = vmatprep.subr.mxu0 0.0
        %1035 = vmatpush1.msra.mxu0 0.0
        %1036 = vmatprep.subr.mxu0 0.0
        %1037 = vmatpush1.msra.mxu0 0.0
        %1038 = vmatprep.mubr.f32.mxu0 0.0
        %1039 = vmatmul.mubr.f32.gmra.mrb[0].mxu0 %v972
        %v1040 = vpop.f32.mrb[0].mxu0
        %v1041 = vadd.f32 0.0, %v1040
        %v1042 = vpop.f32.mrb[0].mxu0
        %1043 = vdwg.mxu0
        %v1044 = vmul.f32 %v1041, %v600
        %v1045 = vmul.f32 %v970, %v970
        %v1046 = vsub.f32 %v1044, %v1045
        %v1047 = vadd.f32 %v1046, 1e-05
        %v1048 = vrsqrt.pop %v1047
        %v1049 = vlaneseq
        %v1050 = vshrl.u32 %v1049, 7
        %v1051 = vsub.s32 0, %v1050
        %v1052 = vrot.slane %v970, %v1051
        %v1053 = vsub.f32 %v815, %v1052
        %v1054 = vsub.f32 %v818, %v1052
        %v1055 = vsub.f32 %v823, %v1052
        %v1056 = vsub.f32 %v826, %v1052
        %v1057 = vsub.f32 %v831, %v1052
        %v1058 = vsub.f32 %v834, %v1052
        %v1059 = vsub.f32 %v839, %v1052
        %v1060 = vsub.f32 %v842, %v1052
        %v1061 = vlaneseq
        %v1062 = vshrl.u32 %v1061, 7
        %v1063 = vsub.s32 0, %v1062
        %v1064 = vrot.slane %v1048, %v1063
        %v1065 = vmul.f32 %v1053, %v1064
        %v1066 = vmul.f32 %v1054, %v1064
        %v1067 = vmul.f32 %v1055, %v1064
        %v1068 = vmul.f32 %v1056, %v1064
        %v1069 = vmul.f32 %v1057, %v1064
        %v1070 = vmul.f32 %v1058, %v1064
        %v1071 = vmul.f32 %v1059, %v1064
        %v1072 = vmul.f32 %v1060, %v1064
        %v1074 = vlaneseq
        %v1075 = vshrl.u32 %v1074, 7
        %v1076 = vsub.s32 0, %v1075
        %v1077 = vrot.slane %v845, %v1076
        %v1079 = vmul.f32 %v1065, %v1077
        %v1080 = vmul.f32 %v1066, %v1077
        %v1081 = vmul.f32 %v1067, %v1077
        %v1082 = vmul.f32 %v1068, %v1077
        %v1083 = vmul.f32 %v1069, %v1077
        %v1084 = vmul.f32 %v1070, %v1077
        %v1085 = vmul.f32 %v1071, %v1077
        %v1086 = vmul.f32 %v1072, %v1077
        %v1088 = vlaneseq
        %v1089 = vshrl.u32 %v1088, 7
        %v1090 = vsub.s32 0, %v1089
        %v1091 = vrot.slane %v846, %v1090
        %v1093 = vadd.f32 %v1079, %v1091
        %v1094 = vadd.f32 %v1080, %v1091
        %v1095 = vadd.f32 %v1081, %v1091
        %v1096 = vadd.f32 %v1082, %v1091
        %v1097 = vadd.f32 %v1083, %v1091
        %v1098 = vadd.f32 %v1084, %v1091
        %v1099 = vadd.f32 %v1085, %v1091
        %v1100 = vadd.f32 %v1086, %v1091
        %v1101 = vadd.f32 %v724, %v1093
        %v1102 = vadd.f32 %v725, %v1094
        %v1103 = vadd.f32 %v726, %v1095
        %v1104 = vadd.f32 %v727, %v1096
        %v1105 = vadd.f32 %v728, %v1097
        %v1106 = vadd.f32 %v729, %v1098
        %v1107 = vadd.f32 %v730, %v1099
        %v1108 = vadd.f32 %v731, %v1100
        %v1109 = vmax.f32 %v1101, 0.0
        %v1110 = vmax.f32 %v1102, 0.0
        %v1111 = vmax.f32 %v1103, 0.0
        %v1112 = vmax.f32 %v1104, 0.0
        %v1113 = vmax.f32 %v1105, 0.0
        %v1114 = vmax.f32 %v1106, 0.0
        %v1115 = vmax.f32 %v1107, 0.0
        %v1116 = vmax.f32 %v1108, 0.0
        %1117 = vst.msk [vmem:[%s340] sm:$0xff] %vm476, %v1109
        %1118 = vst.msk [vmem:[%s340 + $0x8] sm:$0xff] %vm476, %v1110
        %1119 = vst.msk [vmem:[%s340 + $0x10] sm:$0xff] %vm476, %v1111
        %1120 = vst.msk [vmem:[%s340 + $0x18] sm:$0xff] %vm476, %v1112
        %1121 = vst.msk [vmem:[%s340 + $0x20] sm:$0xff] %vm476, %v1113
        %1122 = vst.msk [vmem:[%s340 + $0x28] sm:$0xff] %vm476, %v1114
        %1123 = vst.msk [vmem:[%s340 + $0x30] sm:$0xff] %vm476, %v1115
        %1124 = vst.msk [vmem:[%s340 + $0x38] sm:$0xff] %vm476, %v1116
        %s1125 = sand.u32 %s230, 1
        %s1126 = scalar_lea.sflag [#allocation3], %s1125
        %s1127 = sand.u32 %s230, 1
        %s1128 = smul.addr %s1127, 64
        %s1129 = scalar_lea.vmem [#allocation2], %s1128
        // Predicated region
        $region57: #{bottleneck_forward.5} parent=55 // pred_check
          %p1130 = pneg %p240
        $region58: #{bottleneck_forward.5} parent=55 // pred_check_branch
          %1132 = sbr.rel (%p1130) target = $region60
        $region59: #{bottleneck_forward.5} parent=55 // pred_region
          %s1134 = ssub.s32 1024, 1024
          %1135 = vsyncadd %s1126, %s1134
          %s1136 = smul.addr %s23, 8
          %s1137 = smul.addr %s1136, 128
          %s1138 = scalar_lea.hbm %s9, %s1137
          %s1139 = sshll.u32 %s1129, 4
          %s1140 = int_to_ptr.vmem [resolvable:$true] %s1139
          %1145 = dma.vmem_to_hbm [thread:$0]  %s1140, 1024, %s1138, %s1126, 128, 128, 8
        $region60: #{bottleneck_forward.5} parent=55 // pred_fallthru
          _
      $region56: #{bottleneck_forward.5} parent=5 // pred_fallthru
        _
      %p1146 = scmp.le.s32.totalorder 2, %s18
      // Predicated region
      $region61: #{bottleneck_forward.5} parent=5 // pred_check
        %p1147 = pneg %p1146
      $region62: #{bottleneck_forward.5} parent=5 // pred_check_branch
        %1149 = sbr.rel (%p1147) target = $region64
      $region63: #{bottleneck_forward.5} parent=5 // pred_region
        %s1150 = ssub.s32 %s18, 2
        // Predicated region
        $region65: #{bottleneck_forward.5} parent=63 // pred_check
          %p1151 = pneg %p246
        $region66: #{bottleneck_forward.5} parent=63 // pred_check_branch
          %1153 = sbr.rel (%p1151) target = $region68
        $region67: #{bottleneck_forward.5} parent=63 // pred_region
          %s1154 = sand.u32 %s231, 1
          %s1155 = scalar_lea.sflag [#allocation3], %s1154
          %s1156 = sand.u32 %s231, 1
          %s1157 = smul.addr %s1156, 64
          %s1158 = scalar_lea.vmem [#allocation2], %s1157
          %1159 = dma.done %s1155, 1024
        $region68: #{bottleneck_forward.5} parent=63 // pred_fallthru
          _
      $region64: #{bottleneck_forward.5} parent=5 // pred_fallthru
        _
    $region6: #{bottleneck_forward.5} parent=1 // loop_footer
      %s22 = sadd.s32 1, %s18
    $region7: #{bottleneck_forward.5} parent=1 // loop_footer_branch
      %17 = sbr.rel target = $region3
    $region8: #{bottleneck_forward.5} parent=1 // loop_exit
      _
    %1160 = vsyncpa [#allocation3], 1
    %s1161 = scalar_lea.sflag [#allocation3], 1
    %1162 = vsyncpa %s1161, 1

</llo_original>
